<compile_context>
chip_gen: v7x
topology: tpu7x:2x2x1
jax: 0.10.0
libtpu: 0.0.40
codegen_flags: <defaults>
</compile_context>

<pallas_src>
import functools
import math

import jax
import jax.numpy as jnp
from jax import lax
from jax.experimental import pallas as pl
from jax.experimental.pallas import tpu as pltpu


# ----------------------------------------------------------------------------
# Tiled linear (GEMM + bias) kernels
# ----------------------------------------------------------------------------
def _linear_bias_kernel(x_ref, w_ref, b_ref, o_ref):
    # Fast path: the whole contraction fits in one K block -> no accumulator.
    o_ref[...] = (
        jnp.dot(x_ref[...], w_ref[...], preferred_element_type=jnp.float32)
        + b_ref[...].astype(jnp.float32)
    ).astype(o_ref.dtype)


def _linear_acc_kernel(x_ref, w_ref, b_ref, o_ref, acc_ref):
    @pl.when(pl.program_id(2) == 0)
    def _():
        acc_ref[...] = jnp.zeros_like(acc_ref)

    acc_ref[...] += jnp.dot(
        x_ref[...], w_ref[...], preferred_element_type=jnp.float32
    )

    @pl.when(pl.program_id(2) == pl.num_programs(2) - 1)
    def _():
        o_ref[...] = (acc_ref[...] + b_ref[...].astype(jnp.float32)).astype(o_ref.dtype)


def _round_up(x, m):
    return (x + m - 1) // m * m


def _tile_and_pad(dim, target, unit):
    """Return (tile, padded_dim).

    dim <= target            -> full dim (block == array dim is always legal).
    dim > target, divisible  -> largest unit-multiple divisor <= target.
    dim > target, otherwise  -> tile = target (rounded to unit) and the dim is
                                zero-padded up to a multiple of it (never fall
                                back to a huge full-dim block)."""
    if dim <= target:
        return dim, dim
    t = (target // unit) * unit
    cand = t
    while cand >= unit:
        if dim % cand == 0:
            return cand, dim
        cand -= unit
    return t, _round_up(dim, t)


def _pick_tile(dim, target, unit):
    """Largest unit-multiple divisor of dim that is <= target (or full dim)."""
    if dim <= target:
        return dim
    t = (target // unit) * unit
    while t >= unit:
        if dim % t == 0:
            return t
        t -= unit
    return dim


def linear_pallas(x2d, w, b, *, tm_target=512, tn_target=512, tk_target=512):
    """x2d: (M, K), w: (K, N), b: (N,) -> (M, N). Tiled, pipelined GEMM."""
    M, K = x2d.shape
    K2, N = w.shape
    assert K == K2 and b.shape == (N,)
    tm, Mp = _tile_and_pad(M, tm_target, 8)
    tk, Kp = _tile_and_pad(K, tk_target, 128)
    tn, Np = _tile_and_pad(N, tn_target, 128)
    if (Mp, Kp) != (M, K):
        x2d = jnp.pad(x2d, ((0, Mp - M), (0, Kp - K)))
    if (Kp, Np) != (K, N):
        w = jnp.pad(w, ((0, Kp - K), (0, Np - N)))
    if Np != N:
        b = jnp.pad(b, (0, Np - N))
    b2d = b.reshape(1, Np)

    if Kp // tk == 1:
        out = pl.pallas_call(
            _linear_bias_kernel,
            out_shape=jax.ShapeDtypeStruct((Mp, Np), x2d.dtype),
            grid=(Mp // tm, Np // tn),
            in_specs=[
                pl.BlockSpec((tm, Kp), lambda i, j: (i, 0)),
                pl.BlockSpec((Kp, tn), lambda i, j: (0, j)),
                pl.BlockSpec((1, tn), lambda i, j: (0, j)),
            ],
            out_specs=pl.BlockSpec((tm, tn), lambda i, j: (i, j)),
            compiler_params=pltpu.CompilerParams(
                dimension_semantics=("parallel", "parallel")
            ),
        )(x2d, w, b2d)
    else:
        out = pl.pallas_call(
            _linear_acc_kernel,
            out_shape=jax.ShapeDtypeStruct((Mp, Np), x2d.dtype),
            grid=(Mp // tm, Np // tn, Kp // tk),
            in_specs=[
                pl.BlockSpec((tm, tk), lambda i, j, k: (i, k)),
                pl.BlockSpec((tk, tn), lambda i, j, k: (k, j)),
                pl.BlockSpec((1, tn), lambda i, j, k: (0, j)),
            ],
            out_specs=pl.BlockSpec((tm, tn), lambda i, j, k: (i, j)),
            scratch_shapes=[pltpu.VMEM((tm, tn), jnp.float32)],
            compiler_params=pltpu.CompilerParams(
                dimension_semantics=("parallel", "parallel", "arbitrary")
            ),
        )(x2d, w, b2d)

    if (Mp, Np) != (M, N):
        out = out[:M, :N]
    return out


# ----------------------------------------------------------------------------
# Flash-style cross-attention kernel
#   grid = (batch, q tiles, kv tiles); online softmax over the kv axis.
# ----------------------------------------------------------------------------
def _flash_xattn_kernel(q_ref, k_ref, v_ref, o_ref, m_sc, l_sc, acc_sc,
                        *, heads, attn_ch, scale):
    # q_ref : (1, tq,  width)   width = heads * attn_ch
    # k_ref : (1, tkv, width)   per-head contiguous [k_0 | k_1 | ...]
    # v_ref : (1, tkv, width)   per-head contiguous [v_0 | v_1 | ...]
    # o_ref : (1, tq,  width)   lane-dense output slab (stored once)
    # m_sc  : (heads, tq, 1) f32  running max
    # l_sc  : (heads, tq, 1) f32  running denominator
    # acc_sc: (tq, width)    f32  running numerator (full width, lane dense)
    kv_i = pl.program_id(2)

    @pl.when(kv_i == 0)
    def _():
        m_sc[...] = jnp.full_like(m_sc, -jnp.inf)
        l_sc[...] = jnp.zeros_like(l_sc)
        acc_sc[...] = jnp.zeros_like(acc_sc)

    scale2 = scale * scale  # both scale multiplies folded into the q side
    # TODO(synk): once head slices are 128-lane aligned (attn_ch*group >= 128),
    # move head groups onto a grid axis to widen the MXU calls further.
    for h in range(heads):  # static unroll; heads is a small Python int
        hs, he = h * attn_ch, (h + 1) * attn_ch
        q_h = q_ref[0, :, hs:he] * scale2          # native dtype (no fp32 upcast)
        k_h = k_ref[0, :, hs:he]
        v_h = v_ref[0, :, hs:he]
        # scores: contract the channel axes directly; MXU accumulates in fp32
        s = lax.dot_general(
            q_h, k_h, (((1,), (1,)), ((), ())),
            preferred_element_type=jnp.float32,
        )  # (tq, tkv) fp32
        m_prev = m_sc[h]                                         # (tq, 1)
        m_new = jnp.maximum(m_prev, jnp.max(s, axis=-1, keepdims=True))
        alpha = jnp.exp(m_prev - m_new)
        p = jnp.exp(s - m_new)
        l_sc[h] = alpha * l_sc[h] + jnp.sum(p, axis=-1, keepdims=True)
        pv = jnp.dot(p.astype(v_h.dtype), v_h, preferred_element_type=jnp.float32)
        acc_sc[:, hs:he] = alpha * acc_sc[:, hs:he] + pv
        m_sc[h] = m_new

    @pl.when(kv_i == pl.num_programs(2) - 1)
    def _():
        for h in range(heads):
            hs, he = h * attn_ch, (h + 1) * attn_ch
            inv_l = pl.reciprocal(l_sc[h], approx=True)
            acc_sc[:, hs:he] = acc_sc[:, hs:he] * inv_l
        # single lane-dense store of the full (tq, width) slab
        o_ref[0] = acc_sc[...].astype(o_ref.dtype)


def attention_pallas(q, k, v, *, heads, attn_ch, scale,
                     tq_target=256, tkv_target=512):
    """q: (bs, n_ctx, width), k/v: (bs, n_data, width) -> (bs, n_ctx, width)."""
    bs, n_ctx, width = q.shape
    _, n_data, _ = k.shape
    tq = _pick_tile(n_ctx, tq_target, 8)
    # TODO(synk): non-divisible n_data needs masked zero-padding of the kv tiles;
    # here we fall back to a divisor (or the full dim) instead.
    tkv = _pick_tile(n_data, tkv_target, 8)
    kern = functools.partial(_flash_xattn_kernel, heads=heads,
                             attn_ch=attn_ch, scale=scale)
    return pl.pallas_call(
        kern,
        out_shape=jax.ShapeDtypeStruct((bs, n_ctx, width), q.dtype),
        grid=(bs, n_ctx // tq, n_data // tkv),
        in_specs=[
            pl.BlockSpec((1, tq, width), lambda b, qi, ki: (b, qi, 0)),
            pl.BlockSpec((1, tkv, width), lambda b, qi, ki: (b, ki, 0)),
            pl.BlockSpec((1, tkv, width), lambda b, qi, ki: (b, ki, 0)),
        ],
        out_specs=pl.BlockSpec((1, tq, width), lambda b, qi, ki: (b, qi, 0)),
        scratch_shapes=[
            pltpu.VMEM((heads, tq, 1), jnp.float32),   # running max
            pltpu.VMEM((heads, tq, 1), jnp.float32),   # running denom
            pltpu.VMEM((tq, width), jnp.float32),      # running numerator
        ],
        compiler_params=pltpu.CompilerParams(
            dimension_semantics=("parallel", "parallel", "arbitrary")
        ),
    )(q, k, v)


# ----------------------------------------------------------------------------
# Module: parameters + forward
# ----------------------------------------------------------------------------
def init_params(key, width, data_width, init_scale, dtype=jnp.float32):
    """Deterministic synthetic init (shapes match nn.Linear in the module).

    c_kv_w / c_kv_b use the torch channel layout: per head [k_h | v_h]."""
    ks = jax.random.split(key, 3)
    std_q = init_scale / math.sqrt(width)
    std_kv = init_scale / math.sqrt(data_width)
    std_p = init_scale / math.sqrt(width)
    return {
        # stored as (in, out) so the kernel does x @ W + b
        "c_q_w": (jax.random.normal(ks[0], (width, width)) * std_q).astype(dtype),
        "c_q_b": jnp.zeros((width,), dtype),
        "c_kv_w": (jax.random.normal(ks[1], (data_width, 2 * width)) * std_kv).astype(dtype),
        "c_kv_b": jnp.zeros((2 * width,), dtype),
        "c_proj_w": (jax.random.normal(ks[2], (width, width)) * std_p).astype(dtype),
        "c_proj_b": jnp.zeros((width,), dtype),
    }


def _kv_head_perm(width, heads):
    """Column indices that de-interleave the c_kv output into [K_all | V_all]."""
    attn_ch = width // heads
    idx = jnp.arange(width)
    h = idx // attn_ch
    c = idx % attn_ch
    k_cols = h * (2 * attn_ch) + c
    v_cols = k_cols + attn_ch
    return k_cols, v_cols


def multihead_cross_attention(params, x, data, *, heads):
    """Forward pass of MultiheadCrossAttention.

    x:    (bs, n_ctx, width)
    data: (bs, n_data, data_width)
    returns (bs, n_ctx, width)
    """
    bs, n_ctx, width = x.shape
    _, n_data, data_width = data.shape
    assert width % heads == 0, "width must be divisible by heads"
    attn_ch = (2 * width) // heads // 2  # == width // heads
    scale = 1.0 / math.sqrt(math.sqrt(attn_ch))

    # c_q projection
    q = linear_pallas(x.reshape(bs * n_ctx, width),
                      params["c_q_w"], params["c_q_b"]).reshape(bs, n_ctx, width)

    # c_kv projection, de-interleaved into separate K / V slabs so per-head
    # slices inside the attention kernel are contiguous lane ranges.
    k_cols, v_cols = _kv_head_perm(width, heads)
    data2d = data.reshape(bs * n_data, data_width)
    k = linear_pallas(data2d, params["c_kv_w"][:, k_cols],
                      params["c_kv_b"][k_cols]).reshape(bs, n_data, width)
    v = linear_pallas(data2d, params["c_kv_w"][:, v_cols],
                      params["c_kv_b"][v_cols]).reshape(bs, n_data, width)

    # QKVMultiheadCrossAttention (flash-style, online softmax over kv tiles)
    o = attention_pallas(q, k, v, heads=heads, attn_ch=attn_ch, scale=scale)

    # c_proj
    out = linear_pallas(o.reshape(bs * n_ctx, width),
                        params["c_proj_w"], params["c_proj_b"])
    return out.reshape(bs, n_ctx, width)


# ----------------------------------------------------------------------------
# Pure-JAX reference (for verification) — mirrors the torch module exactly.
# ----------------------------------------------------------------------------
def reference_forward(params, x, data, *, heads):
    bs, n_ctx, width = x.shape
    _, n_data, data_width = data.shape
    q = x.reshape(-1, width) @ params["c_q_w"] + params["c_q_b"]
    q = q.reshape(bs, n_ctx, width)
    kv = data.reshape(-1, data_width) @ params["c_kv_w"] + params["c_kv_b"]
    kv = kv.reshape(bs, n_data, 2 * width)

    attn_ch = (2 * width) // heads // 2
    scale = 1.0 / math.sqrt(math.sqrt(attn_ch))
    q = q.reshape(bs, n_ctx, heads, attn_ch)
    kv = kv.reshape(bs, n_data, heads, 2 * attn_ch)
    k, v = kv[..., :attn_ch], kv[..., attn_ch:]
    w = jnp.einsum("bthc,bshc->bhts", q * scale, k * scale)
    w = jax.nn.softmax(w.astype(jnp.float32), axis=-1).astype(w.dtype)
    o = jnp.einsum("bhts,bshc->bthc", w, v).reshape(bs, n_ctx, -1)
    return o @ params["c_proj_w"] + params["c_proj_b"]


# ----------------------------------------------------------------------------
if __name__ == "__main__":
    key = jax.random.PRNGKey(0)
    k_param, k_x, k_d = jax.random.split(key, 3)

    # small shapes consistent with the module
    bs, n_ctx, n_data = 2, 8, 16
    width, data_width, heads = 32, 32, 4
    init_scale = 0.25

    params = init_params(k_param, width, data_width, init_scale)
    x = jax.random.normal(k_x, (bs, n_ctx, width), dtype=jnp.float32)
    data = jax.random.normal(k_d, (bs, n_data, data_width), dtype=jnp.float32)

    fwd = jax.jit(functools.partial(multihead_cross_attention, heads=heads))
    out = fwd(params, x, data)
    out = jax.block_until_ready(out)

    ref = reference_forward(params, x, data, heads=heads)
    assert out.shape == (bs, n_ctx, width)
    # Tolerance covers the EUP approximate reciprocal (~2^-12 relative) used in
    # the online-softmax normalization; still tight enough to catch real bugs.
    assert jnp.allclose(out, ref, atol=2e-3, rtol=2e-3), "mismatch vs JAX reference"

    print("KERNEL_OK")
</pallas_src>

<mosaic_0001>
module attributes {stable_mosaic.version = 11 : i64} {
  func.func @_linear_bias_kernel(%arg0: i32, %arg1: i32, %arg2: memref<32x32xf32, #tpu.memory_space<vmem>>, %arg3: memref<32x32xf32, #tpu.memory_space<vmem>>, %arg4: memref<1x32xf32, #tpu.memory_space<vmem>>, %arg5: memref<32x32xf32, #tpu.memory_space<vmem>>) attributes {dimension_semantics = [#tpu.dimension_semantics<parallel>, #tpu.dimension_semantics<parallel>], iteration_bounds = array<i64: 1, 1>, scalar_prefetch = 0 : i64, scratch_operands = 0 : i64, tpu.core_type = #tpu.core_type<tc>, window_params = [{transform_indices = @transform_0, window_bounds = array<i64: 32, 32>}, {transform_indices = @transform_1, window_bounds = array<i64: 32, 32>}, {transform_indices = @transform_2, window_bounds = array<i64: 1, 32>}, {transform_indices = @transform_3, window_bounds = array<i64: 32, 32>}]} {
    %c0 = arith.constant 0 : index
    %c0_0 = arith.constant 0 : index
    %0 = vector.load %arg2[%c0, %c0_0] : memref<32x32xf32, #tpu.memory_space<vmem>>, vector<32x32xf32>
    %c0_1 = arith.constant 0 : index
    %c0_2 = arith.constant 0 : index
    %1 = vector.load %arg3[%c0_1, %c0_2] : memref<32x32xf32, #tpu.memory_space<vmem>>, vector<32x32xf32>
    %cst = arith.constant dense<0.000000e+00> : vector<32x32xf32>
    %2 = tpu.matmul %0, %1, %cst {dimension_numbers = #tpu.dot_dimension_numbers<[1], [0], [0], [1], [0, 0, 1, 1], [], []>} : vector<32x32xf32>, vector<32x32xf32>, vector<32x32xf32> -> vector<32x32xf32>
    %c0_3 = arith.constant 0 : index
    %c0_4 = arith.constant 0 : index
    %3 = vector.load %arg4[%c0_3, %c0_4] : memref<1x32xf32, #tpu.memory_space<vmem>>, vector<1x32xf32>
    %4 = vector.broadcast %3 : vector<1x32xf32> to vector<32x32xf32>
    %5 = arith.addf %2, %4 : vector<32x32xf32>
    %c0_5 = arith.constant 0 : index
    %c0_6 = arith.constant 0 : index
    %6 = vector.load %arg5[%c0_5, %c0_6] : memref<32x32xf32, #tpu.memory_space<vmem>>, vector<32x32xf32>
    tpu.vector_store %arg5[%c0_5, %c0_6], %5 {strides = array<i32>} : memref<32x32xf32, #tpu.memory_space<vmem>>, vector<32x32xf32>,
    return
  }
  func.func @transform_0(%arg0: i32, %arg1: i32) -> (i32, i32) {
    %c0_i32 = arith.constant 0 : i32
    %c0_i32_0 = arith.constant 0 : i32
    return %arg0, %c0_i32 : i32, i32
  }
  func.func @transform_1(%arg0: i32, %arg1: i32) -> (i32, i32) {
    %c0_i32 = arith.constant 0 : i32
    %c0_i32_0 = arith.constant 0 : i32
    return %c0_i32, %arg1 : i32, i32
  }
  func.func @transform_2(%arg0: i32, %arg1: i32) -> (i32, i32) {
    %c0_i32 = arith.constant 0 : i32
    %c0_i32_0 = arith.constant 0 : i32
    return %c0_i32, %arg1 : i32, i32
  }
  func.func @transform_3(%arg0: i32, %arg1: i32) -> (i32, i32) {
    %c0_i32 = arith.constant 0 : i32
    return %arg0, %arg1 : i32, i32
  }
}

module attributes {stable_mosaic.version = 11 : i64} {
  func.func @_linear_bias_kernel(%arg0: i32, %arg1: i32, %arg2: memref<16x32xf32, #tpu.memory_space<vmem>>, %arg3: memref<32x32xf32, #tpu.memory_space<vmem>>, %arg4: memref<1x32xf32, #tpu.memory_space<vmem>>, %arg5: memref<16x32xf32, #tpu.memory_space<vmem>>) attributes {dimension_semantics = [#tpu.dimension_semantics<parallel>, #tpu.dimension_semantics<parallel>], iteration_bounds = array<i64: 1, 1>, scalar_prefetch = 0 : i64, scratch_operands = 0 : i64, tpu.core_type = #tpu.core_type<tc>, window_params = [{transform_indices = @transform_0, window_bounds = array<i64: 16, 32>}, {transform_indices = @transform_1, window_bounds = array<i64: 32, 32>}, {transform_indices = @transform_2, window_bounds = array<i64: 1, 32>}, {transform_indices = @transform_3, window_bounds = array<i64: 16, 32>}]} {
    %c0 = arith.constant 0 : index
    %c0_0 = arith.constant 0 : index
    %0 = vector.load %arg2[%c0, %c0_0] : memref<16x32xf32, #tpu.memory_space<vmem>>, vector<16x32xf32>
    %c0_1 = arith.constant 0 : index
    %c0_2 = arith.constant 0 : index
    %1 = vector.load %arg3[%c0_1, %c0_2] : memref<32x32xf32, #tpu.memory_space<vmem>>, vector<32x32xf32>
    %cst = arith.constant dense<0.000000e+00> : vector<16x32xf32>
    %2 = tpu.matmul %0, %1, %cst {dimension_numbers = #tpu.dot_dimension_numbers<[1], [0], [0], [1], [0, 0, 1, 1], [], []>} : vector<16x32xf32>, vector<32x32xf32>, vector<16x32xf32> -> vector<16x32xf32>
    %c0_3 = arith.constant 0 : index
    %c0_4 = arith.constant 0 : index
    %3 = vector.load %arg4[%c0_3, %c0_4] : memref<1x32xf32, #tpu.memory_space<vmem>>, vector<1x32xf32>
    %4 = vector.broadcast %3 : vector<1x32xf32> to vector<16x32xf32>
    %5 = arith.addf %2, %4 : vector<16x32xf32>
    %c0_5 = arith.constant 0 : index
    %c0_6 = arith.constant 0 : index
    %6 = vector.load %arg5[%c0_5, %c0_6] : memref<16x32xf32, #tpu.memory_space<vmem>>, vector<16x32xf32>
    tpu.vector_store %arg5[%c0_5, %c0_6], %5 {strides = array<i32>} : memref<16x32xf32, #tpu.memory_space<vmem>>, vector<16x32xf32>,
    return
  }
  func.func @transform_0(%arg0: i32, %arg1: i32) -> (i32, i32) {
    %c0_i32 = arith.constant 0 : i32
    %c0_i32_0 = arith.constant 0 : i32
    return %arg0, %c0_i32 : i32, i32
  }
  func.func @transform_1(%arg0: i32, %arg1: i32) -> (i32, i32) {
    %c0_i32 = arith.constant 0 : i32
    %c0_i32_0 = arith.constant 0 : i32
    return %c0_i32, %arg1 : i32, i32
  }
  func.func @transform_2(%arg0: i32, %arg1: i32) -> (i32, i32) {
    %c0_i32 = arith.constant 0 : i32
    %c0_i32_0 = arith.constant 0 : i32
    return %c0_i32, %arg1 : i32, i32
  }
  func.func @transform_3(%arg0: i32, %arg1: i32) -> (i32, i32) {
    %c0_i32 = arith.constant 0 : i32
    return %arg0, %arg1 : i32, i32
  }
}

module attributes {stable_mosaic.version = 11 : i64} {
  func.func @_flash_xattn_kernel(%arg0: i32, %arg1: i32, %arg2: i32, %arg3: memref<1x8x32xf32, #tpu.memory_space<vmem>>, %arg4: memref<1x16x32xf32, #tpu.memory_space<vmem>>, %arg5: memref<1x16x32xf32, #tpu.memory_space<vmem>>, %arg6: memref<1x8x32xf32, #tpu.memory_space<vmem>>, %arg7: memref<4x8x1xf32, #tpu.memory_space<vmem>>, %arg8: memref<4x8x1xf32, #tpu.memory_space<vmem>>, %arg9: memref<8x32xf32, #tpu.memory_space<vmem>>) attributes {dimension_semantics = [#tpu.dimension_semantics<parallel>, #tpu.dimension_semantics<parallel>, #tpu.dimension_semantics<arbitrary>], iteration_bounds = array<i64: 2, 1, 1>, scalar_prefetch = 0 : i64, scratch_operands = 3 : i64, tpu.core_type = #tpu.core_type<tc>, window_params = [{transform_indices = @transform_0, window_bounds = array<i64: 1, 8, 32>}, {transform_indices = @transform_1, window_bounds = array<i64: 1, 16, 32>}, {transform_indices = @transform_2, window_bounds = array<i64: 1, 16, 32>}, {transform_indices = @transform_3, window_bounds = array<i64: 1, 8, 32>}]} {
    %c0_i32 = arith.constant 0 : i32
    %0 = arith.cmpi eq, %arg2, %c0_i32 : i32
    %1 = arith.extui %0 : i1 to i32
    %c0_i32_0 = arith.constant 0 : i32
    %2 = arith.cmpi ne, %1, %c0_i32_0 : i32
    scf.if %2 {
      %cst_115 = arith.constant 0xFF800000 : f32
      %154 = vector.broadcast %cst_115 : f32 to vector<4x8x1xf32>
      %c0_116 = arith.constant 0 : index
      %c0_117 = arith.constant 0 : index
      %c0_118 = arith.constant 0 : index
      %155 = vector.load %arg7[%c0_116, %c0_117, %c0_118] : memref<4x8x1xf32, #tpu.memory_space<vmem>>, vector<4x8x1xf32>
      tpu.vector_store %arg7[%c0_116, %c0_117, %c0_118], %154 {strides = array<i32>} : memref<4x8x1xf32, #tpu.memory_space<vmem>>, vector<4x8x1xf32>,
      %cst_119 = arith.constant 0.000000e+00 : f32
      %156 = vector.broadcast %cst_119 : f32 to vector<4x8x1xf32>
      %c0_120 = arith.constant 0 : index
      %c0_121 = arith.constant 0 : index
      %c0_122 = arith.constant 0 : index
      %157 = vector.load %arg8[%c0_120, %c0_121, %c0_122] : memref<4x8x1xf32, #tpu.memory_space<vmem>>, vector<4x8x1xf32>
      tpu.vector_store %arg8[%c0_120, %c0_121, %c0_122], %156 {strides = array<i32>} : memref<4x8x1xf32, #tpu.memory_space<vmem>>, vector<4x8x1xf32>,
      %cst_123 = arith.constant 0.000000e+00 : f32
      %158 = vector.broadcast %cst_123 : f32 to vector<8x32xf32>
      %c0_124 = arith.constant 0 : index
      %c0_125 = arith.constant 0 : index
      %159 = vector.load %arg9[%c0_124, %c0_125] : memref<8x32xf32, #tpu.memory_space<vmem>>, vector<8x32xf32>
      tpu.vector_store %arg9[%c0_124, %c0_125], %158 {strides = array<i32>} : memref<8x32xf32, #tpu.memory_space<vmem>>, vector<8x32xf32>,
    } else {
    }
    %c0 = arith.constant 0 : index
    %c0_1 = arith.constant 0 : index
    %c0_2 = arith.constant 0 : index
    %3 = vector.load %arg3[%c0, %c0_1, %c0_2] : memref<1x8x32xf32, #tpu.memory_space<vmem>>, vector<1x8x8xf32>
    %4 = vector.shape_cast %3 : vector<1x8x8xf32> to vector<8x8xf32>
    %cst = arith.constant 0.353553385 : f32
    %5 = vector.broadcast %cst : f32 to vector<8x8xf32>
    %6 = arith.mulf %4, %5 : vector<8x8xf32>
    %c0_3 = arith.constant 0 : index
    %c0_4 = arith.constant 0 : index
    %c0_5 = arith.constant 0 : index
    %7 = vector.load %arg4[%c0_3, %c0_4, %c0_5] : memref<1x16x32xf32, #tpu.memory_space<vmem>>, vector<1x16x8xf32>
    %8 = vector.shape_cast %7 : vector<1x16x8xf32> to vector<16x8xf32>
    %c0_6 = arith.constant 0 : index
    %c0_7 = arith.constant 0 : index
    %c0_8 = arith.constant 0 : index
    %9 = vector.load %arg5[%c0_6, %c0_7, %c0_8] : memref<1x16x32xf32, #tpu.memory_space<vmem>>, vector<1x16x8xf32>
    %10 = vector.shape_cast %9 : vector<1x16x8xf32> to vector<16x8xf32>
    %cst_9 = arith.constant dense<0.000000e+00> : vector<8x16xf32>
    %11 = tpu.matmul %6, %8, %cst_9 {dimension_numbers = #tpu.dot_dimension_numbers<[1], [1], [0], [0], [0, 0, 1, 0], [], []>} : vector<8x8xf32>, vector<16x8xf32>, vector<8x16xf32> -> vector<8x16xf32>
    %c0_10 = arith.constant 0 : index
    %c0_11 = arith.constant 0 : index
    %c0_12 = arith.constant 0 : index
    %12 = vector.load %arg7[%c0_10, %c0_11, %c0_12] : memref<4x8x1xf32, #tpu.memory_space<vmem>>, vector<1x8x1xf32>
    %13 = vector.shape_cast %12 : vector<1x8x1xf32> to vector<8x1xf32>
    %cst_13 = arith.constant dense<0xFF800000> : vector<8xf32>
    %14 = vector.multi_reduction <maximumf>, %11, %cst_13 [1] : vector<8x16xf32> to vector<8xf32>
    %15 = vector.shape_cast %14 : vector<8xf32> to vector<8x1xf32>
    %16 = arith.maximumf %13, %15 : vector<8x1xf32>
    %17 = arith.subf %13, %16 : vector<8x1xf32>
    %18 = math.exp %17 : vector<8x1xf32>
    %19 = vector.broadcast %16 : vector<8x1xf32> to vector<8x16xf32>
    %20 = arith.subf %11, %19 : vector<8x16xf32>
    %21 = math.exp %20 : vector<8x16xf32>
    %c0_14 = arith.constant 0 : index
    %c0_15 = arith.constant 0 : index
    %c0_16 = arith.constant 0 : index
    %22 = vector.load %arg8[%c0_14, %c0_15, %c0_16] : memref<4x8x1xf32, #tpu.memory_space<vmem>>, vector<1x8x1xf32>
    %23 = vector.shape_cast %22 : vector<1x8x1xf32> to vector<8x1xf32>
    %24 = arith.mulf %18, %23 : vector<8x1xf32>
    %cst_17 = arith.constant dense<0.000000e+00> : vector<8xf32>
    %25 = vector.multi_reduction <add>, %21, %cst_17 [1] : vector<8x16xf32> to vector<8xf32>
    %26 = vector.shape_cast %25 : vector<8xf32> to vector<8x1xf32>
    %27 = arith.addf %24, %26 : vector<8x1xf32>
    %c0_18 = arith.constant 0 : index
    %c0_19 = arith.constant 0 : index
    %c0_20 = arith.constant 0 : index
    %28 = vector.load %arg8[%c0_18, %c0_19, %c0_20] : memref<4x8x1xf32, #tpu.memory_space<vmem>>, vector<1x8x1xf32>
    %29 = vector.shape_cast %28 : vector<1x8x1xf32> to vector<8x1xf32>
    %30 = vector.shape_cast %27 : vector<8x1xf32> to vector<1x8x1xf32>
    tpu.vector_store %arg8[%c0_18, %c0_19, %c0_20], %30 {strides = array<i32>} : memref<4x8x1xf32, #tpu.memory_space<vmem>>, vector<1x8x1xf32>,
    %cst_21 = arith.constant dense<0.000000e+00> : vector<8x8xf32>
    %31 = tpu.matmul %21, %10, %cst_21 {dimension_numbers = #tpu.dot_dimension_numbers<[1], [0], [0], [1], [0, 0, 1, 1], [], []>} : vector<8x16xf32>, vector<16x8xf32>, vector<8x8xf32> -> vector<8x8xf32>
    %c0_22 = arith.constant 0 : index
    %c0_23 = arith.constant 0 : index
    %32 = vector.load %arg9[%c0_22, %c0_23] : memref<8x32xf32, #tpu.memory_space<vmem>>, vector<8x8xf32>
    %33 = vector.broadcast %18 : vector<8x1xf32> to vector<8x8xf32>
    %34 = arith.mulf %33, %32 : vector<8x8xf32>
    %35 = arith.addf %34, %31 : vector<8x8xf32>
    %c0_24 = arith.constant 0 : index
    %c0_25 = arith.constant 0 : index
    %36 = vector.load %arg9[%c0_24, %c0_25] : memref<8x32xf32, #tpu.memory_space<vmem>>, vector<8x8xf32>
    tpu.vector_store %arg9[%c0_24, %c0_25], %35 {strides = array<i32>} : memref<8x32xf32, #tpu.memory_space<vmem>>, vector<8x8xf32>,
    %c0_26 = arith.constant 0 : index
    %c0_27 = arith.constant 0 : index
    %c0_28 = arith.constant 0 : index
    %37 = vector.load %arg7[%c0_26, %c0_27, %c0_28] : memref<4x8x1xf32, #tpu.memory_space<vmem>>, vector<1x8x1xf32>
    %38 = vector.shape_cast %37 : vector<1x8x1xf32> to vector<8x1xf32>
    %39 = vector.shape_cast %16 : vector<8x1xf32> to vector<1x8x1xf32>
    tpu.vector_store %arg7[%c0_26, %c0_27, %c0_28], %39 {strides = array<i32>} : memref<4x8x1xf32, #tpu.memory_space<vmem>>, vector<1x8x1xf32>,
    %c0_29 = arith.constant 0 : index
    %c0_30 = arith.constant 0 : index
    %c8 = arith.constant 8 : index
    %40 = vector.load %arg3[%c0_29, %c0_30, %c8] : memref<1x8x32xf32, #tpu.memory_space<vmem>>, vector<1x8x8xf32>
    %41 = vector.shape_cast %40 : vector<1x8x8xf32> to vector<8x8xf32>
    %cst_31 = arith.constant 0.353553385 : f32
    %42 = vector.broadcast %cst_31 : f32 to vector<8x8xf32>
    %43 = arith.mulf %41, %42 : vector<8x8xf32>
    %c0_32 = arith.constant 0 : index
    %c0_33 = arith.constant 0 : index
    %c8_34 = arith.constant 8 : index
    %44 = vector.load %arg4[%c0_32, %c0_33, %c8_34] : memref<1x16x32xf32, #tpu.memory_space<vmem>>, vector<1x16x8xf32>
    %45 = vector.shape_cast %44 : vector<1x16x8xf32> to vector<16x8xf32>
    %c0_35 = arith.constant 0 : index
    %c0_36 = arith.constant 0 : index
    %c8_37 = arith.constant 8 : index
    %46 = vector.load %arg5[%c0_35, %c0_36, %c8_37] : memref<1x16x32xf32, #tpu.memory_space<vmem>>, vector<1x16x8xf32>
    %47 = vector.shape_cast %46 : vector<1x16x8xf32> to vector<16x8xf32>
    %cst_38 = arith.constant dense<0.000000e+00> : vector<8x16xf32>
    %48 = tpu.matmul %43, %45, %cst_38 {dimension_numbers = #tpu.dot_dimension_numbers<[1], [1], [0], [0], [0, 0, 1, 0], [], []>} : vector<8x8xf32>, vector<16x8xf32>, vector<8x16xf32> -> vector<8x16xf32>
    %c1 = arith.constant 1 : index
    %c0_39 = arith.constant 0 : index
    %c0_40 = arith.constant 0 : index
    %49 = vector.load %arg7[%c1, %c0_39, %c0_40] : memref<4x8x1xf32, #tpu.memory_space<vmem>>, vector<1x8x1xf32>
    %50 = vector.shape_cast %49 : vector<1x8x1xf32> to vector<8x1xf32>
    %cst_41 = arith.constant dense<0xFF800000> : vector<8xf32>
    %51 = vector.multi_reduction <maximumf>, %48, %cst_41 [1] : vector<8x16xf32> to vector<8xf32>
    %52 = vector.shape_cast %51 : vector<8xf32> to vector<8x1xf32>
    %53 = arith.maximumf %50, %52 : vector<8x1xf32>
    %54 = arith.subf %50, %53 : vector<8x1xf32>
    %55 = math.exp %54 : vector<8x1xf32>
    %56 = vector.broadcast %53 : vector<8x1xf32> to vector<8x16xf32>
    %57 = arith.subf %48, %56 : vector<8x16xf32>
    %58 = math.exp %57 : vector<8x16xf32>
    %c1_42 = arith.constant 1 : index
    %c0_43 = arith.constant 0 : index
    %c0_44 = arith.constant 0 : index
    %59 = vector.load %arg8[%c1_42, %c0_43, %c0_44] : memref<4x8x1xf32, #tpu.memory_space<vmem>>, vector<1x8x1xf32>
    %60 = vector.shape_cast %59 : vector<1x8x1xf32> to vector<8x1xf32>
    %61 = arith.mulf %55, %60 : vector<8x1xf32>
    %cst_45 = arith.constant dense<0.000000e+00> : vector<8xf32>
    %62 = vector.multi_reduction <add>, %58, %cst_45 [1] : vector<8x16xf32> to vector<8xf32>
    %63 = vector.shape_cast %62 : vector<8xf32> to vector<8x1xf32>
    %64 = arith.addf %61, %63 : vector<8x1xf32>
    %c1_46 = arith.constant 1 : index
    %c0_47 = arith.constant 0 : index
    %c0_48 = arith.constant 0 : index
    %65 = vector.load %arg8[%c1_46, %c0_47, %c0_48] : memref<4x8x1xf32, #tpu.memory_space<vmem>>, vector<1x8x1xf32>
    %66 = vector.shape_cast %65 : vector<1x8x1xf32> to vector<8x1xf32>
    %67 = vector.shape_cast %64 : vector<8x1xf32> to vector<1x8x1xf32>
    tpu.vector_store %arg8[%c1_46, %c0_47, %c0_48], %67 {strides = array<i32>} : memref<4x8x1xf32, #tpu.memory_space<vmem>>, vector<1x8x1xf32>,
    %cst_49 = arith.constant dense<0.000000e+00> : vector<8x8xf32>
    %68 = tpu.matmul %58, %47, %cst_49 {dimension_numbers = #tpu.dot_dimension_numbers<[1], [0], [0], [1], [0, 0, 1, 1], [], []>} : vector<8x16xf32>, vector<16x8xf32>, vector<8x8xf32> -> vector<8x8xf32>
    %c0_50 = arith.constant 0 : index
    %c8_51 = arith.constant 8 : index
    %69 = vector.load %arg9[%c0_50, %c8_51] : memref<8x32xf32, #tpu.memory_space<vmem>>, vector<8x8xf32>
    %70 = vector.broadcast %55 : vector<8x1xf32> to vector<8x8xf32>
    %71 = arith.mulf %70, %69 : vector<8x8xf32>
    %72 = arith.addf %71, %68 : vector<8x8xf32>
    %c0_52 = arith.constant 0 : index
    %c8_53 = arith.constant 8 : index
    %73 = vector.load %arg9[%c0_52, %c8_53] : memref<8x32xf32, #tpu.memory_space<vmem>>, vector<8x8xf32>
    tpu.vector_store %arg9[%c0_52, %c8_53], %72 {strides = array<i32>} : memref<8x32xf32, #tpu.memory_space<vmem>>, vector<8x8xf32>,
    %c1_54 = arith.constant 1 : index
    %c0_55 = arith.constant 0 : index
    %c0_56 = arith.constant 0 : index
    %74 = vector.load %arg7[%c1_54, %c0_55, %c0_56] : memref<4x8x1xf32, #tpu.memory_space<vmem>>, vector<1x8x1xf32>
    %75 = vector.shape_cast %74 : vector<1x8x1xf32> to vector<8x1xf32>
    %76 = vector.shape_cast %53 : vector<8x1xf32> to vector<1x8x1xf32>
    tpu.vector_store %arg7[%c1_54, %c0_55, %c0_56], %76 {strides = array<i32>} : memref<4x8x1xf32, #tpu.memory_space<vmem>>, vector<1x8x1xf32>,
    %c0_57 = arith.constant 0 : index
    %c0_58 = arith.constant 0 : index
    %c16 = arith.constant 16 : index
    %77 = vector.load %arg3[%c0_57, %c0_58, %c16] : memref<1x8x32xf32, #tpu.memory_space<vmem>>, vector<1x8x8xf32>
    %78 = vector.shape_cast %77 : vector<1x8x8xf32> to vector<8x8xf32>
    %cst_59 = arith.constant 0.353553385 : f32
    %79 = vector.broadcast %cst_59 : f32 to vector<8x8xf32>
    %80 = arith.mulf %78, %79 : vector<8x8xf32>
    %c0_60 = arith.constant 0 : index
    %c0_61 = arith.constant 0 : index
    %c16_62 = arith.constant 16 : index
    %81 = vector.load %arg4[%c0_60, %c0_61, %c16_62] : memref<1x16x32xf32, #tpu.memory_space<vmem>>, vector<1x16x8xf32>
    %82 = vector.shape_cast %81 : vector<1x16x8xf32> to vector<16x8xf32>
    %c0_63 = arith.constant 0 : index
    %c0_64 = arith.constant 0 : index
    %c16_65 = arith.constant 16 : index
    %83 = vector.load %arg5[%c0_63, %c0_64, %c16_65] : memref<1x16x32xf32, #tpu.memory_space<vmem>>, vector<1x16x8xf32>
    %84 = vector.shape_cast %83 : vector<1x16x8xf32> to vector<16x8xf32>
    %cst_66 = arith.constant dense<0.000000e+00> : vector<8x16xf32>
    %85 = tpu.matmul %80, %82, %cst_66 {dimension_numbers = #tpu.dot_dimension_numbers<[1], [1], [0], [0], [0, 0, 1, 0], [], []>} : vector<8x8xf32>, vector<16x8xf32>, vector<8x16xf32> -> vector<8x16xf32>
    %c2 = arith.constant 2 : index
    %c0_67 = arith.constant 0 : index
    %c0_68 = arith.constant 0 : index
    %86 = vector.load %arg7[%c2, %c0_67, %c0_68] : memref<4x8x1xf32, #tpu.memory_space<vmem>>, vector<1x8x1xf32>
    %87 = vector.shape_cast %86 : vector<1x8x1xf32> to vector<8x1xf32>
    %cst_69 = arith.constant dense<0xFF800000> : vector<8xf32>
    %88 = vector.multi_reduction <maximumf>, %85, %cst_69 [1] : vector<8x16xf32> to vector<8xf32>
    %89 = vector.shape_cast %88 : vector<8xf32> to vector<8x1xf32>
    %90 = arith.maximumf %87, %89 : vector<8x1xf32>
    %91 = arith.subf %87, %90 : vector<8x1xf32>
    %92 = math.exp %91 : vector<8x1xf32>
    %93 = vector.broadcast %90 : vector<8x1xf32> to vector<8x16xf32>
    %94 = arith.subf %85, %93 : vector<8x16xf32>
    %95 = math.exp %94 : vector<8x16xf32>
    %c2_70 = arith.constant 2 : index
    %c0_71 = arith.constant 0 : index
    %c0_72 = arith.constant 0 : index
    %96 = vector.load %arg8[%c2_70, %c0_71, %c0_72] : memref<4x8x1xf32, #tpu.memory_space<vmem>>, vector<1x8x1xf32>
    %97 = vector.shape_cast %96 : vector<1x8x1xf32> to vector<8x1xf32>
    %98 = arith.mulf %92, %97 : vector<8x1xf32>
    %cst_73 = arith.constant dense<0.000000e+00> : vector<8xf32>
    %99 = vector.multi_reduction <add>, %95, %cst_73 [1] : vector<8x16xf32> to vector<8xf32>
    %100 = vector.shape_cast %99 : vector<8xf32> to vector<8x1xf32>
    %101 = arith.addf %98, %100 : vector<8x1xf32>
    %c2_74 = arith.constant 2 : index
    %c0_75 = arith.constant 0 : index
    %c0_76 = arith.constant 0 : index
    %102 = vector.load %arg8[%c2_74, %c0_75, %c0_76] : memref<4x8x1xf32, #tpu.memory_space<vmem>>, vector<1x8x1xf32>
    %103 = vector.shape_cast %102 : vector<1x8x1xf32> to vector<8x1xf32>
    %104 = vector.shape_cast %101 : vector<8x1xf32> to vector<1x8x1xf32>
    tpu.vector_store %arg8[%c2_74, %c0_75, %c0_76], %104 {strides = array<i32>} : memref<4x8x1xf32, #tpu.memory_space<vmem>>, vector<1x8x1xf32>,
    %cst_77 = arith.constant dense<0.000000e+00> : vector<8x8xf32>
    %105 = tpu.matmul %95, %84, %cst_77 {dimension_numbers = #tpu.dot_dimension_numbers<[1], [0], [0], [1], [0, 0, 1, 1], [], []>} : vector<8x16xf32>, vector<16x8xf32>, vector<8x8xf32> -> vector<8x8xf32>
    %c0_78 = arith.constant 0 : index
    %c16_79 = arith.constant 16 : index
    %106 = vector.load %arg9[%c0_78, %c16_79] : memref<8x32xf32, #tpu.memory_space<vmem>>, vector<8x8xf32>
    %107 = vector.broadcast %92 : vector<8x1xf32> to vector<8x8xf32>
    %108 = arith.mulf %107, %106 : vector<8x8xf32>
    %109 = arith.addf %108, %105 : vector<8x8xf32>
    %c0_80 = arith.constant 0 : index
    %c16_81 = arith.constant 16 : index
    %110 = vector.load %arg9[%c0_80, %c16_81] : memref<8x32xf32, #tpu.memory_space<vmem>>, vector<8x8xf32>
    tpu.vector_store %arg9[%c0_80, %c16_81], %109 {strides = array<i32>} : memref<8x32xf32, #tpu.memory_space<vmem>>, vector<8x8xf32>,
    %c2_82 = arith.constant 2 : index
    %c0_83 = arith.constant 0 : index
    %c0_84 = arith.constant 0 : index
    %111 = vector.load %arg7[%c2_82, %c0_83, %c0_84] : memref<4x8x1xf32, #tpu.memory_space<vmem>>, vector<1x8x1xf32>
    %112 = vector.shape_cast %111 : vector<1x8x1xf32> to vector<8x1xf32>
    %113 = vector.shape_cast %90 : vector<8x1xf32> to vector<1x8x1xf32>
    tpu.vector_store %arg7[%c2_82, %c0_83, %c0_84], %113 {strides = array<i32>} : memref<4x8x1xf32, #tpu.memory_space<vmem>>, vector<1x8x1xf32>,
    %c0_85 = arith.constant 0 : index
    %c0_86 = arith.constant 0 : index
    %c24 = arith.constant 24 : index
    %114 = vector.load %arg3[%c0_85, %c0_86, %c24] : memref<1x8x32xf32, #tpu.memory_space<vmem>>, vector<1x8x8xf32>
    %115 = vector.shape_cast %114 : vector<1x8x8xf32> to vector<8x8xf32>
    %cst_87 = arith.constant 0.353553385 : f32
    %116 = vector.broadcast %cst_87 : f32 to vector<8x8xf32>
    %117 = arith.mulf %115, %116 : vector<8x8xf32>
    %c0_88 = arith.constant 0 : index
    %c0_89 = arith.constant 0 : index
    %c24_90 = arith.constant 24 : index
    %118 = vector.load %arg4[%c0_88, %c0_89, %c24_90] : memref<1x16x32xf32, #tpu.memory_space<vmem>>, vector<1x16x8xf32>
    %119 = vector.shape_cast %118 : vector<1x16x8xf32> to vector<16x8xf32>
    %c0_91 = arith.constant 0 : index
    %c0_92 = arith.constant 0 : index
    %c24_93 = arith.constant 24 : index
    %120 = vector.load %arg5[%c0_91, %c0_92, %c24_93] : memref<1x16x32xf32, #tpu.memory_space<vmem>>, vector<1x16x8xf32>
    %121 = vector.shape_cast %120 : vector<1x16x8xf32> to vector<16x8xf32>
    %cst_94 = arith.constant dense<0.000000e+00> : vector<8x16xf32>
    %122 = tpu.matmul %117, %119, %cst_94 {dimension_numbers = #tpu.dot_dimension_numbers<[1], [1], [0], [0], [0, 0, 1, 0], [], []>} : vector<8x8xf32>, vector<16x8xf32>, vector<8x16xf32> -> vector<8x16xf32>
    %c3 = arith.constant 3 : index
    %c0_95 = arith.constant 0 : index
    %c0_96 = arith.constant 0 : index
    %123 = vector.load %arg7[%c3, %c0_95, %c0_96] : memref<4x8x1xf32, #tpu.memory_space<vmem>>, vector<1x8x1xf32>
    %124 = vector.shape_cast %123 : vector<1x8x1xf32> to vector<8x1xf32>
    %cst_97 = arith.constant dense<0xFF800000> : vector<8xf32>
    %125 = vector.multi_reduction <maximumf>, %122, %cst_97 [1] : vector<8x16xf32> to vector<8xf32>
    %126 = vector.shape_cast %125 : vector<8xf32> to vector<8x1xf32>
    %127 = arith.maximumf %124, %126 : vector<8x1xf32>
    %128 = arith.subf %124, %127 : vector<8x1xf32>
    %129 = math.exp %128 : vector<8x1xf32>
    %130 = vector.broadcast %127 : vector<8x1xf32> to vector<8x16xf32>
    %131 = arith.subf %122, %130 : vector<8x16xf32>
    %132 = math.exp %131 : vector<8x16xf32>
    %c3_98 = arith.constant 3 : index
    %c0_99 = arith.constant 0 : index
    %c0_100 = arith.constant 0 : index
    %133 = vector.load %arg8[%c3_98, %c0_99, %c0_100] : memref<4x8x1xf32, #tpu.memory_space<vmem>>, vector<1x8x1xf32>
    %134 = vector.shape_cast %133 : vector<1x8x1xf32> to vector<8x1xf32>
    %135 = arith.mulf %129, %134 : vector<8x1xf32>
    %cst_101 = arith.constant dense<0.000000e+00> : vector<8xf32>
    %136 = vector.multi_reduction <add>, %132, %cst_101 [1] : vector<8x16xf32> to vector<8xf32>
    %137 = vector.shape_cast %136 : vector<8xf32> to vector<8x1xf32>
    %138 = arith.addf %135, %137 : vector<8x1xf32>
    %c3_102 = arith.constant 3 : index
    %c0_103 = arith.constant 0 : index
    %c0_104 = arith.constant 0 : index
    %139 = vector.load %arg8[%c3_102, %c0_103, %c0_104] : memref<4x8x1xf32, #tpu.memory_space<vmem>>, vector<1x8x1xf32>
    %140 = vector.shape_cast %139 : vector<1x8x1xf32> to vector<8x1xf32>
    %141 = vector.shape_cast %138 : vector<8x1xf32> to vector<1x8x1xf32>
    tpu.vector_store %arg8[%c3_102, %c0_103, %c0_104], %141 {strides = array<i32>} : memref<4x8x1xf32, #tpu.memory_space<vmem>>, vector<1x8x1xf32>,
    %cst_105 = arith.constant dense<0.000000e+00> : vector<8x8xf32>
    %142 = tpu.matmul %132, %121, %cst_105 {dimension_numbers = #tpu.dot_dimension_numbers<[1], [0], [0], [1], [0, 0, 1, 1], [], []>} : vector<8x16xf32>, vector<16x8xf32>, vector<8x8xf32> -> vector<8x8xf32>
    %c0_106 = arith.constant 0 : index
    %c24_107 = arith.constant 24 : index
    %143 = vector.load %arg9[%c0_106, %c24_107] : memref<8x32xf32, #tpu.memory_space<vmem>>, vector<8x8xf32>
    %144 = vector.broadcast %129 : vector<8x1xf32> to vector<8x8xf32>
    %145 = arith.mulf %144, %143 : vector<8x8xf32>
    %146 = arith.addf %145, %142 : vector<8x8xf32>
    %c0_108 = arith.constant 0 : index
    %c24_109 = arith.constant 24 : index
    %147 = vector.load %arg9[%c0_108, %c24_109] : memref<8x32xf32, #tpu.memory_space<vmem>>, vector<8x8xf32>
    tpu.vector_store %arg9[%c0_108, %c24_109], %146 {strides = array<i32>} : memref<8x32xf32, #tpu.memory_space<vmem>>, vector<8x8xf32>,
    %c3_110 = arith.constant 3 : index
    %c0_111 = arith.constant 0 : index
    %c0_112 = arith.constant 0 : index
    %148 = vector.load %arg7[%c3_110, %c0_111, %c0_112] : memref<4x8x1xf32, #tpu.memory_space<vmem>>, vector<1x8x1xf32>
    %149 = vector.shape_cast %148 : vector<1x8x1xf32> to vector<8x1xf32>
    %150 = vector.shape_cast %127 : vector<8x1xf32> to vector<1x8x1xf32>
    tpu.vector_store %arg7[%c3_110, %c0_111, %c0_112], %150 {strides = array<i32>} : memref<4x8x1xf32, #tpu.memory_space<vmem>>, vector<1x8x1xf32>,
    %c0_i32_113 = arith.constant 0 : i32
    %151 = arith.cmpi eq, %arg2, %c0_i32_113 : i32
    %152 = arith.extui %151 : i1 to i32
    %c0_i32_114 = arith.constant 0 : i32
    %153 = arith.cmpi ne, %152, %c0_i32_114 : i32
    scf.if %153 {
      %c0_115 = arith.constant 0 : index
      %c0_116 = arith.constant 0 : index
      %c0_117 = arith.constant 0 : index
      %154 = vector.load %arg8[%c0_115, %c0_116, %c0_117] : memref<4x8x1xf32, #tpu.memory_space<vmem>>, vector<1x8x1xf32>
      %155 = vector.shape_cast %154 : vector<1x8x1xf32> to vector<8x1xf32>
      %156 = tpu.reciprocal %155 {approx = true} : vector<8x1xf32> -> vector<8x1xf32>
      %c0_118 = arith.constant 0 : index
      %c0_119 = arith.constant 0 : index
      %157 = vector.load %arg9[%c0_118, %c0_119] : memref<8x32xf32, #tpu.memory_space<vmem>>, vector<8x8xf32>
      %158 = vector.broadcast %156 : vector<8x1xf32> to vector<8x8xf32>
      %159 = arith.mulf %157, %158 : vector<8x8xf32>
      %c0_120 = arith.constant 0 : index
      %c0_121 = arith.constant 0 : index
      %160 = vector.load %arg9[%c0_120, %c0_121] : memref<8x32xf32, #tpu.memory_space<vmem>>, vector<8x8xf32>
      tpu.vector_store %arg9[%c0_120, %c0_121], %159 {strides = array<i32>} : memref<8x32xf32, #tpu.memory_space<vmem>>, vector<8x8xf32>,
      %c1_122 = arith.constant 1 : index
      %c0_123 = arith.constant 0 : index
      %c0_124 = arith.constant 0 : index
      %161 = vector.load %arg8[%c1_122, %c0_123, %c0_124] : memref<4x8x1xf32, #tpu.memory_space<vmem>>, vector<1x8x1xf32>
      %162 = vector.shape_cast %161 : vector<1x8x1xf32> to vector<8x1xf32>
      %163 = tpu.reciprocal %162 {approx = true} : vector<8x1xf32> -> vector<8x1xf32>
      %c0_125 = arith.constant 0 : index
      %c8_126 = arith.constant 8 : index
      %164 = vector.load %arg9[%c0_125, %c8_126] : memref<8x32xf32, #tpu.memory_space<vmem>>, vector<8x8xf32>
      %165 = vector.broadcast %163 : vector<8x1xf32> to vector<8x8xf32>
      %166 = arith.mulf %164, %165 : vector<8x8xf32>
      %c0_127 = arith.constant 0 : index
      %c8_128 = arith.constant 8 : index
      %167 = vector.load %arg9[%c0_127, %c8_128] : memref<8x32xf32, #tpu.memory_space<vmem>>, vector<8x8xf32>
      tpu.vector_store %arg9[%c0_127, %c8_128], %166 {strides = array<i32>} : memref<8x32xf32, #tpu.memory_space<vmem>>, vector<8x8xf32>,
      %c2_129 = arith.constant 2 : index
      %c0_130 = arith.constant 0 : index
      %c0_131 = arith.constant 0 : index
      %168 = vector.load %arg8[%c2_129, %c0_130, %c0_131] : memref<4x8x1xf32, #tpu.memory_space<vmem>>, vector<1x8x1xf32>
      %169 = vector.shape_cast %168 : vector<1x8x1xf32> to vector<8x1xf32>
      %170 = tpu.reciprocal %169 {approx = true} : vector<8x1xf32> -> vector<8x1xf32>
      %c0_132 = arith.constant 0 : index
      %c16_133 = arith.constant 16 : index
      %171 = vector.load %arg9[%c0_132, %c16_133] : memref<8x32xf32, #tpu.memory_space<vmem>>, vector<8x8xf32>
      %172 = vector.broadcast %170 : vector<8x1xf32> to vector<8x8xf32>
      %173 = arith.mulf %171, %172 : vector<8x8xf32>
      %c0_134 = arith.constant 0 : index
      %c16_135 = arith.constant 16 : index
      %174 = vector.load %arg9[%c0_134, %c16_135] : memref<8x32xf32, #tpu.memory_space<vmem>>, vector<8x8xf32>
      tpu.vector_store %arg9[%c0_134, %c16_135], %173 {strides = array<i32>} : memref<8x32xf32, #tpu.memory_space<vmem>>, vector<8x8xf32>,
      %c3_136 = arith.constant 3 : index
      %c0_137 = arith.constant 0 : index
      %c0_138 = arith.constant 0 : index
      %175 = vector.load %arg8[%c3_136, %c0_137, %c0_138] : memref<4x8x1xf32, #tpu.memory_space<vmem>>, vector<1x8x1xf32>
      %176 = vector.shape_cast %175 : vector<1x8x1xf32> to vector<8x1xf32>
      %177 = tpu.reciprocal %176 {approx = true} : vector<8x1xf32> -> vector<8x1xf32>
      %c0_139 = arith.constant 0 : index
      %c24_140 = arith.constant 24 : index
      %178 = vector.load %arg9[%c0_139, %c24_140] : memref<8x32xf32, #tpu.memory_space<vmem>>, vector<8x8xf32>
      %179 = vector.broadcast %177 : vector<8x1xf32> to vector<8x8xf32>
      %180 = arith.mulf %178, %179 : vector<8x8xf32>
      %c0_141 = arith.constant 0 : index
      %c24_142 = arith.constant 24 : index
      %181 = vector.load %arg9[%c0_141, %c24_142] : memref<8x32xf32, #tpu.memory_space<vmem>>, vector<8x8xf32>
      tpu.vector_store %arg9[%c0_141, %c24_142], %180 {strides = array<i32>} : memref<8x32xf32, #tpu.memory_space<vmem>>, vector<8x8xf32>,
      %c0_143 = arith.constant 0 : index
      %c0_144 = arith.constant 0 : index
      %182 = vector.load %arg9[%c0_143, %c0_144] : memref<8x32xf32, #tpu.memory_space<vmem>>, vector<8x32xf32>
      %c0_145 = arith.constant 0 : index
      %c0_146 = arith.constant 0 : index
      %c0_147 = arith.constant 0 : index
      %183 = vector.load %arg6[%c0_145, %c0_146, %c0_147] : memref<1x8x32xf32, #tpu.memory_space<vmem>>, vector<1x8x32xf32>
      %184 = vector.shape_cast %183 : vector<1x8x32xf32> to vector<8x32xf32>
      %185 = vector.shape_cast %182 : vector<8x32xf32> to vector<1x8x32xf32>
      tpu.vector_store %arg6[%c0_145, %c0_146, %c0_147], %185 {strides = array<i32>} : memref<1x8x32xf32, #tpu.memory_space<vmem>>, vector<1x8x32xf32>,
    } else {
    }
    return
  }
  func.func @transform_0(%arg0: i32, %arg1: i32, %arg2: i32) -> (i32, i32, i32) {
    %c0_i32 = arith.constant 0 : i32
    %c0_i32_0 = arith.constant 0 : i32
    return %arg0, %arg1, %c0_i32 : i32, i32, i32
  }
  func.func @transform_1(%arg0: i32, %arg1: i32, %arg2: i32) -> (i32, i32, i32) {
    %c0_i32 = arith.constant 0 : i32
    %c0_i32_0 = arith.constant 0 : i32
    return %arg0, %arg2, %c0_i32 : i32, i32, i32
  }
  func.func @transform_2(%arg0: i32, %arg1: i32, %arg2: i32) -> (i32, i32, i32) {
    %c0_i32 = arith.constant 0 : i32
    %c0_i32_0 = arith.constant 0 : i32
    return %arg0, %arg2, %c0_i32 : i32, i32, i32
  }
  func.func @transform_3(%arg0: i32, %arg1: i32, %arg2: i32) -> (i32, i32, i32) {
    %c0_i32 = arith.constant 0 : i32
    %c0_i32_0 = arith.constant 0 : i32
    return %arg0, %arg1, %c0_i32 : i32, i32, i32
  }
}

module attributes {stable_mosaic.version = 11 : i64} {
  func.func @_linear_bias_kernel(%arg0: i32, %arg1: i32, %arg2: memref<16x32xf32, #tpu.memory_space<vmem>>, %arg3: memref<32x32xf32, #tpu.memory_space<vmem>>, %arg4: memref<1x32xf32, #tpu.memory_space<vmem>>, %arg5: memref<16x32xf32, #tpu.memory_space<vmem>>) attributes {dimension_semantics = [#tpu.dimension_semantics<parallel>, #tpu.dimension_semantics<parallel>], iteration_bounds = array<i64: 1, 1>, scalar_prefetch = 0 : i64, scratch_operands = 0 : i64, tpu.core_type = #tpu.core_type<tc>, window_params = [{transform_indices = @transform_0, window_bounds = array<i64: 16, 32>}, {transform_indices = @transform_1, window_bounds = array<i64: 32, 32>}, {transform_indices = @transform_2, window_bounds = array<i64: 1, 32>}, {transform_indices = @transform_3, window_bounds = array<i64: 16, 32>}]} {
    %c0 = arith.constant 0 : index
    %c0_0 = arith.constant 0 : index
    %0 = vector.load %arg2[%c0, %c0_0] : memref<16x32xf32, #tpu.memory_space<vmem>>, vector<16x32xf32>
    %c0_1 = arith.constant 0 : index
    %c0_2 = arith.constant 0 : index
    %1 = vector.load %arg3[%c0_1, %c0_2] : memref<32x32xf32, #tpu.memory_space<vmem>>, vector<32x32xf32>
    %cst = arith.constant dense<0.000000e+00> : vector<16x32xf32>
    %2 = tpu.matmul %0, %1, %cst {dimension_numbers = #tpu.dot_dimension_numbers<[1], [0], [0], [1], [0, 0, 1, 1], [], []>} : vector<16x32xf32>, vector<32x32xf32>, vector<16x32xf32> -> vector<16x32xf32>
    %c0_3 = arith.constant 0 : index
    %c0_4 = arith.constant 0 : index
    %3 = vector.load %arg4[%c0_3, %c0_4] : memref<1x32xf32, #tpu.memory_space<vmem>>, vector<1x32xf32>
    %4 = vector.broadcast %3 : vector<1x32xf32> to vector<16x32xf32>
    %5 = arith.addf %2, %4 : vector<16x32xf32>
    %c0_5 = arith.constant 0 : index
    %c0_6 = arith.constant 0 : index
    %6 = vector.load %arg5[%c0_5, %c0_6] : memref<16x32xf32, #tpu.memory_space<vmem>>, vector<16x32xf32>
    tpu.vector_store %arg5[%c0_5, %c0_6], %5 {strides = array<i32>} : memref<16x32xf32, #tpu.memory_space<vmem>>, vector<16x32xf32>,
    return
  }
  func.func @transform_0(%arg0: i32, %arg1: i32) -> (i32, i32) {
    %c0_i32 = arith.constant 0 : i32
    %c0_i32_0 = arith.constant 0 : i32
    return %arg0, %c0_i32 : i32, i32
  }
  func.func @transform_1(%arg0: i32, %arg1: i32) -> (i32, i32) {
    %c0_i32 = arith.constant 0 : i32
    %c0_i32_0 = arith.constant 0 : i32
    return %c0_i32, %arg1 : i32, i32
  }
  func.func @transform_2(%arg0: i32, %arg1: i32) -> (i32, i32) {
    %c0_i32 = arith.constant 0 : i32
    %c0_i32_0 = arith.constant 0 : i32
    return %c0_i32, %arg1 : i32, i32
  }
  func.func @transform_3(%arg0: i32, %arg1: i32) -> (i32, i32) {
    %c0_i32 = arith.constant 0 : i32
    return %arg0, %arg1 : i32, i32
  }
}

</mosaic_0001>

<llo_original>
// kernel: multihead_cross_attention.7
$region0: #{multihead_cross_attention.7}
  #allocation0 [shape = 'u32[]', space=smem, size = 0x4, offset = 0x4, fixed_abs, tag = 'smem constant byte address 0x4 - core index']
  #allocation1 [shape = 'u32[144,128]{1,0:T(1,128)}', space=vmem, size = 0x12000, scoped, tag = 'internal scratch']
  %s0 = inlined_call_operand.vmem [shape: f32[32,32], index: 0, kind: input, shape index: {}]
  %s1 = inlined_call_operand.vmem [shape: f32[32,32], index: 1, kind: input, shape index: {}]
  %s2 = inlined_call_operand.vmem [shape: f32[1,32], index: 2, kind: input, shape index: {}]
  %s3 = inlined_call_operand.vmem [shape: f32[32,32], index: 3, kind: output, shape index: {}]
  %s4 = sld [smem:[#allocation0]]
  $region22: #{multihead_cross_attention.7} parent=0
    _
  %s6 = ssub.s32 1, %s4
  %s7 = scalar_select 0, %s6, %s4
  // Predicated region
  $region2: #{multihead_cross_attention.7} parent=0 // pred_check
    _
  $region3: #{multihead_cross_attention.7} parent=0 // pred_check_branch
    %9 = sbr.rel (0) target = $region5
  $region4: #{multihead_cross_attention.7} parent=0 // pred_region
    _
  $region5: #{multihead_cross_attention.7} parent=0 // pred_fallthru
    _
  // Predicated region
  $region6: #{multihead_cross_attention.7} parent=0 // pred_check
    _
  $region7: #{multihead_cross_attention.7} parent=0 // pred_check_branch
    %11 = sbr.rel (0) target = $region9
  $region8: #{multihead_cross_attention.7} parent=0 // pred_region
    _
  $region9: #{multihead_cross_attention.7} parent=0 // pred_fallthru
    _
  // Predicated region
  $region10: #{multihead_cross_attention.7} parent=0 // pred_check
    _
  $region11: #{multihead_cross_attention.7} parent=0 // pred_check_branch
    %13 = sbr.rel (0) target = $region13
  $region12: #{multihead_cross_attention.7} parent=0 // pred_region
    _
  $region13: #{multihead_cross_attention.7} parent=0 // pred_fallthru
    _
  %v14 = vld [vmem:[%s0] sm:$0xff]
  %v15 = vld [vmem:[%s0 + $0x8] sm:$0xff]
  %v16 = vld [vmem:[%s0 + $0x10] sm:$0xff]
  %v17 = vld [vmem:[%s0 + $0x18] sm:$0xff]
  %v18 = vld [vmem:[%s1] sm:$0xff]
  %v19 = vld [vmem:[%s1 + $0x8] sm:$0xff]
  %v20 = vld [vmem:[%s1 + $0x10] sm:$0xff]
  %v21 = vld [vmem:[%s1 + $0x18] sm:$0xff]
  %v22 = vld [vmem:[%s2] sm:$0x1]
  %v24 = vlaneseq
  %v25 = vshrl.u32 %v24, 7
  %v26 = vsub.s32 0, %v25
  %v27 = vrot.slane %v22, %v26
  %vm29 = vcmask 261120
  %v31 = vsel %vm29, %v14, 0
  %v34 = vsel %vm29, %v15, 0
  %v37 = vsel %vm29, %v16, 0
  %v40 = vsel %vm29, %v17, 0
  %42 = vmatprep.subr.mxu0 0.0
  %43 = vmatpush1.msra.mxu0 %v18
  %44 = vmatprep.subr.mxu0 0.0
  %45 = vmatpush1.msra.mxu0 %v19
  %46 = vmatprep.subr.mxu0 0.0
  %47 = vmatpush1.msra.mxu0 %v20
  %48 = vmatprep.subr.mxu0 0.0
  %49 = vmatpush1.msra.mxu0 %v21
  %50 = vmatprep.subr.mxu0 0.0
  %51 = vmatpush1.msra.mxu0 0.0
  %52 = vmatprep.subr.mxu0 0.0
  %53 = vmatpush1.msra.mxu0 0.0
  %54 = vmatprep.subr.mxu0 0.0
  %55 = vmatpush1.msra.mxu0 0.0
  %56 = vmatprep.subr.mxu0 0.0
  %57 = vmatpush1.msra.mxu0 0.0
  %58 = vmatprep.subr.mxu0 0.0
  %59 = vmatpush1.msra.mxu0 0.0
  %60 = vmatprep.subr.mxu0 0.0
  %61 = vmatpush1.msra.mxu0 0.0
  %62 = vmatprep.subr.mxu0 0.0
  %63 = vmatpush1.msra.mxu0 0.0
  %64 = vmatprep.subr.mxu0 0.0
  %65 = vmatpush1.msra.mxu0 0.0
  %66 = vmatprep.subr.mxu0 0.0
  %67 = vmatpush1.msra.mxu0 0.0
  %68 = vmatprep.subr.mxu0 0.0
  %69 = vmatpush1.msra.mxu0 0.0
  %70 = vmatprep.subr.mxu0 0.0
  %71 = vmatpush1.msra.mxu0 0.0
  %72 = vmatprep.subr.mxu0 0.0
  %73 = vmatpush1.msra.mxu0 0.0
  %74 = vmatprep.subr.mxu0 0.0
  %75 = vmatpush1.msra.mxu0 0.0
  %76 = vmatprep.subr.mxu0 0.0
  %77 = vmatpush1.msra.mxu0 0.0
  %78 = vmatprep.subr.mxu0 0.0
  %79 = vmatpush1.msra.mxu0 0.0
  %80 = vmatprep.subr.mxu0 0.0
  %81 = vmatpush1.msra.mxu0 0.0
  %82 = vmatprep.subr.mxu0 0.0
  %83 = vmatpush1.msra.mxu0 0.0
  %84 = vmatprep.subr.mxu0 0.0
  %85 = vmatpush1.msra.mxu0 0.0
  %86 = vmatprep.subr.mxu0 0.0
  %87 = vmatpush1.msra.mxu0 0.0
  %88 = vmatprep.subr.mxu0 0.0
  %89 = vmatpush1.msra.mxu0 0.0
  %90 = vmatprep.subr.mxu0 0.0
  %91 = vmatpush1.msra.mxu0 0.0
  %92 = vmatprep.subr.mxu0 0.0
  %93 = vmatpush1.msra.mxu0 0.0
  %94 = vmatprep.subr.mxu0 0.0
  %95 = vmatpush1.msra.mxu0 0.0
  %96 = vmatprep.subr.mxu0 0.0
  %97 = vmatpush1.msra.mxu0 0.0
  %98 = vmatprep.subr.mxu0 0.0
  %99 = vmatpush1.msra.mxu0 0.0
  %100 = vmatprep.subr.mxu0 0.0
  %101 = vmatpush1.msra.mxu0 0.0
  %102 = vmatprep.subr.mxu0 0.0
  %103 = vmatpush1.msra.mxu0 0.0
  %104 = vmatprep.subr.mxu0 0.0
  %105 = vmatpush1.msra.mxu0 0.0
  %106 = vmatprep.mubr.f32.mxu0 0.0
  %107 = vmatmul.mubr.f32.gmra.mrb[0].mxu0 %v31
  %v108 = vpop.f32.mrb[0].mxu0
  %v109 = vadd.f32 %v27, %v108
  %v110 = vpop.f32.mrb[0].mxu0
  %111 = vmatprep.mubr.f32.mxu0 0.0
  %112 = vmatmul.mubr.f32.gmra.mrb[0].mxu0 %v34
  %v113 = vpop.f32.mrb[0].mxu0
  %v114 = vadd.f32 %v27, %v113
  %v115 = vpop.f32.mrb[0].mxu0
  %116 = vmatprep.mubr.f32.mxu0 0.0
  %117 = vmatmul.mubr.f32.gmra.mrb[0].mxu0 %v37
  %v118 = vpop.f32.mrb[0].mxu0
  %v119 = vadd.f32 %v27, %v118
  %v120 = vpop.f32.mrb[0].mxu0
  %121 = vmatprep.mubr.f32.mxu0 0.0
  %122 = vmatmul.mubr.f32.gmra.mrb[0].mxu0 %v40
  %v123 = vpop.f32.mrb[0].mxu0
  %v124 = vadd.f32 %v27, %v123
  %v125 = vpop.f32.mrb[0].mxu0
  %126 = vdwg.mxu0
  %127 = vst.msk [vmem:[%s3] sm:$0xff] %vm29, %v109
  %128 = vst.msk [vmem:[%s3 + $0x8] sm:$0xff] %vm29, %v114
  %129 = vst.msk [vmem:[%s3 + $0x10] sm:$0xff] %vm29, %v119
  %130 = vst.msk [vmem:[%s3 + $0x18] sm:$0xff] %vm29, %v124
  // Predicated region
  $region14: #{multihead_cross_attention.7} parent=0 // pred_check
    _
  $region15: #{multihead_cross_attention.7} parent=0 // pred_check_branch
    %132 = sbr.rel (0) target = $region17
  $region16: #{multihead_cross_attention.7} parent=0 // pred_region
    _
  $region17: #{multihead_cross_attention.7} parent=0 // pred_fallthru
    _
  // Predicated region
  $region18: #{multihead_cross_attention.7} parent=0 // pred_check
    _
  $region19: #{multihead_cross_attention.7} parent=0 // pred_check_branch
    %134 = sbr.rel (0) target = $region21
  $region20: #{multihead_cross_attention.7} parent=0 // pred_region
    _
  $region21: #{multihead_cross_attention.7} parent=0 // pred_fallthru
    _

// kernel: multihead_cross_attention.5
$region0: #{multihead_cross_attention.5}
  #allocation0 [shape = 'u32[]', space=smem, size = 0x4, offset = 0x4, fixed_abs, tag = 'smem constant byte address 0x4 - core index']
  #allocation1 [shape = 'u32[144,128]{1,0:T(1,128)}', space=vmem, size = 0x12000, scoped, tag = 'internal scratch']
  %s0 = inlined_call_operand.vmem [shape: f32[16,32], index: 0, kind: input, shape index: {}]
  %s1 = inlined_call_operand.vmem [shape: f32[32,32], index: 1, kind: input, shape index: {}]
  %s2 = inlined_call_operand.vmem [shape: f32[1,32], index: 2, kind: input, shape index: {}]
  %s3 = inlined_call_operand.vmem [shape: f32[16,32], index: 3, kind: output, shape index: {}]
  %s4 = sld [smem:[#allocation0]]
  $region22: #{multihead_cross_attention.5} parent=0
    _
  %s6 = ssub.s32 1, %s4
  %s7 = scalar_select 0, %s6, %s4
  // Predicated region
  $region2: #{multihead_cross_attention.5} parent=0 // pred_check
    _
  $region3: #{multihead_cross_attention.5} parent=0 // pred_check_branch
    %9 = sbr.rel (0) target = $region5
  $region4: #{multihead_cross_attention.5} parent=0 // pred_region
    _
  $region5: #{multihead_cross_attention.5} parent=0 // pred_fallthru
    _
  // Predicated region
  $region6: #{multihead_cross_attention.5} parent=0 // pred_check
    _
  $region7: #{multihead_cross_attention.5} parent=0 // pred_check_branch
    %11 = sbr.rel (0) target = $region9
  $region8: #{multihead_cross_attention.5} parent=0 // pred_region
    _
  $region9: #{multihead_cross_attention.5} parent=0 // pred_fallthru
    _
  // Predicated region
  $region10: #{multihead_cross_attention.5} parent=0 // pred_check
    _
  $region11: #{multihead_cross_attention.5} parent=0 // pred_check_branch
    %13 = sbr.rel (0) target = $region13
  $region12: #{multihead_cross_attention.5} parent=0 // pred_region
    _
  $region13: #{multihead_cross_attention.5} parent=0 // pred_fallthru
    _
  %v14 = vld [vmem:[%s0] sm:$0xff]
  %v15 = vld [vmem:[%s0 + $0x8] sm:$0xff]
  %v16 = vld [vmem:[%s1] sm:$0xff]
  %v17 = vld [vmem:[%s1 + $0x8] sm:$0xff]
  %v18 = vld [vmem:[%s1 + $0x10] sm:$0xff]
  %v19 = vld [vmem:[%s1 + $0x18] sm:$0xff]
  %v20 = vld [vmem:[%s2] sm:$0x1]
  %v22 = vlaneseq
  %v23 = vshrl.u32 %v22, 7
  %v24 = vsub.s32 0, %v23
  %v25 = vrot.slane %v20, %v24
  %vm27 = vcmask 261120
  %v29 = vsel %vm27, %v14, 0
  %v32 = vsel %vm27, %v15, 0
  %34 = vmatprep.subr.mxu0 0.0
  %35 = vmatpush1.msra.mxu0 %v16
  %36 = vmatprep.subr.mxu0 0.0
  %37 = vmatpush1.msra.mxu0 %v17
  %38 = vmatprep.subr.mxu0 0.0
  %39 = vmatpush1.msra.mxu0 %v18
  %40 = vmatprep.subr.mxu0 0.0
  %41 = vmatpush1.msra.mxu0 %v19
  %42 = vmatprep.subr.mxu0 0.0
  %43 = vmatpush1.msra.mxu0 0.0
  %44 = vmatprep.subr.mxu0 0.0
  %45 = vmatpush1.msra.mxu0 0.0
  %46 = vmatprep.subr.mxu0 0.0
  %47 = vmatpush1.msra.mxu0 0.0
  %48 = vmatprep.subr.mxu0 0.0
  %49 = vmatpush1.msra.mxu0 0.0
  %50 = vmatprep.subr.mxu0 0.0
  %51 = vmatpush1.msra.mxu0 0.0
  %52 = vmatprep.subr.mxu0 0.0
  %53 = vmatpush1.msra.mxu0 0.0
  %54 = vmatprep.subr.mxu0 0.0
  %55 = vmatpush1.msra.mxu0 0.0
  %56 = vmatprep.subr.mxu0 0.0
  %57 = vmatpush1.msra.mxu0 0.0
  %58 = vmatprep.subr.mxu0 0.0
  %59 = vmatpush1.msra.mxu0 0.0
  %60 = vmatprep.subr.mxu0 0.0
  %61 = vmatpush1.msra.mxu0 0.0
  %62 = vmatprep.subr.mxu0 0.0
  %63 = vmatpush1.msra.mxu0 0.0
  %64 = vmatprep.subr.mxu0 0.0
  %65 = vmatpush1.msra.mxu0 0.0
  %66 = vmatprep.subr.mxu0 0.0
  %67 = vmatpush1.msra.mxu0 0.0
  %68 = vmatprep.subr.mxu0 0.0
  %69 = vmatpush1.msra.mxu0 0.0
  %70 = vmatprep.subr.mxu0 0.0
  %71 = vmatpush1.msra.mxu0 0.0
  %72 = vmatprep.subr.mxu0 0.0
  %73 = vmatpush1.msra.mxu0 0.0
  %74 = vmatprep.subr.mxu0 0.0
  %75 = vmatpush1.msra.mxu0 0.0
  %76 = vmatprep.subr.mxu0 0.0
  %77 = vmatpush1.msra.mxu0 0.0
  %78 = vmatprep.subr.mxu0 0.0
  %79 = vmatpush1.msra.mxu0 0.0
  %80 = vmatprep.subr.mxu0 0.0
  %81 = vmatpush1.msra.mxu0 0.0
  %82 = vmatprep.subr.mxu0 0.0
  %83 = vmatpush1.msra.mxu0 0.0
  %84 = vmatprep.subr.mxu0 0.0
  %85 = vmatpush1.msra.mxu0 0.0
  %86 = vmatprep.subr.mxu0 0.0
  %87 = vmatpush1.msra.mxu0 0.0
  %88 = vmatprep.subr.mxu0 0.0
  %89 = vmatpush1.msra.mxu0 0.0
  %90 = vmatprep.subr.mxu0 0.0
  %91 = vmatpush1.msra.mxu0 0.0
  %92 = vmatprep.subr.mxu0 0.0
  %93 = vmatpush1.msra.mxu0 0.0
  %94 = vmatprep.subr.mxu0 0.0
  %95 = vmatpush1.msra.mxu0 0.0
  %96 = vmatprep.subr.mxu0 0.0
  %97 = vmatpush1.msra.mxu0 0.0
  %98 = vmatprep.mubr.f32.mxu0 0.0
  %99 = vmatmul.mubr.f32.gmra.mrb[0].mxu0 %v29
  %v100 = vpop.f32.mrb[0].mxu0
  %v101 = vadd.f32 %v25, %v100
  %v102 = vpop.f32.mrb[0].mxu0
  %103 = vmatprep.mubr.f32.mxu0 0.0
  %104 = vmatmul.mubr.f32.gmra.mrb[0].mxu0 %v32
  %v105 = vpop.f32.mrb[0].mxu0
  %v106 = vadd.f32 %v25, %v105
  %v107 = vpop.f32.mrb[0].mxu0
  %108 = vdwg.mxu0
  %109 = vst.msk [vmem:[%s3] sm:$0xff] %vm27, %v101
  %110 = vst.msk [vmem:[%s3 + $0x8] sm:$0xff] %vm27, %v106
  // Predicated region
  $region14: #{multihead_cross_attention.5} parent=0 // pred_check
    _
  $region15: #{multihead_cross_attention.5} parent=0 // pred_check_branch
    %112 = sbr.rel (0) target = $region17
  $region16: #{multihead_cross_attention.5} parent=0 // pred_region
    _
  $region17: #{multihead_cross_attention.5} parent=0 // pred_fallthru
    _
  // Predicated region
  $region18: #{multihead_cross_attention.5} parent=0 // pred_check
    _
  $region19: #{multihead_cross_attention.5} parent=0 // pred_check_branch
    %114 = sbr.rel (0) target = $region21
  $region20: #{multihead_cross_attention.5} parent=0 // pred_region
    _
  $region21: #{multihead_cross_attention.5} parent=0 // pred_fallthru
    _

// kernel: multihead_cross_attention.9
$region0: #{multihead_cross_attention.9}
  #allocation0 [shape = 'u32[]', space=smem, size = 0x4, offset = 0x4, fixed_abs, tag = 'smem constant byte address 0x4 - core index']
  #allocation1 [shape = 'u32[144,128]{1,0:T(1,128)}', space=vmem, size = 0x12000, scoped, tag = 'internal scratch']
  %s0 = inlined_call_operand.vmem [shape: f32[16,32], index: 0, kind: input, shape index: {}]
  %s1 = inlined_call_operand.vmem [shape: f32[32,32], index: 1, kind: input, shape index: {}]
  %s2 = inlined_call_operand.vmem [shape: f32[1,32], index: 2, kind: input, shape index: {}]
  %s3 = inlined_call_operand.hbm [shape: f32[16,32], index: 3, kind: output, shape index: {}]
  %s4 = sld [smem:[#allocation0]]
  $region22: #{multihead_cross_attention.9} parent=0
    _
  %s6 = ssub.s32 1, %s4
  %s7 = scalar_select 0, %s6, %s4
  $region1: #{multihead_cross_attention.9} parent=0
    #allocation2 [shape = 'u8[8192]{0}', space=vmem, size = 0x2000, scoped, tag = 'output window, operand 0, single buffered']
    #allocation3 [shape = 's32[1]{0}', space=sflag, size = 0x4, scoped, tag = 'scoped memory for multihead_cross_attention.9']
    %8 = vsyncpa [#allocation3], 0
    // Predicated region
    $region2: #{multihead_cross_attention.9} parent=1 // pred_check
      _
    $region3: #{multihead_cross_attention.9} parent=1 // pred_check_branch
      %10 = sbr.rel (0) target = $region5
    $region4: #{multihead_cross_attention.9} parent=1 // pred_region
      _
    $region5: #{multihead_cross_attention.9} parent=1 // pred_fallthru
      _
    // Predicated region
    $region6: #{multihead_cross_attention.9} parent=1 // pred_check
      _
    $region7: #{multihead_cross_attention.9} parent=1 // pred_check_branch
      %12 = sbr.rel (0) target = $region9
    $region8: #{multihead_cross_attention.9} parent=1 // pred_region
      _
    $region9: #{multihead_cross_attention.9} parent=1 // pred_fallthru
      _
    // Predicated region
    $region10: #{multihead_cross_attention.9} parent=1 // pred_check
      _
    $region11: #{multihead_cross_attention.9} parent=1 // pred_check_branch
      %14 = sbr.rel (0) target = $region13
    $region12: #{multihead_cross_attention.9} parent=1 // pred_region
      _
    $region13: #{multihead_cross_attention.9} parent=1 // pred_fallthru
      _
    %v15 = vld [vmem:[%s0] sm:$0xff]
    %v16 = vld [vmem:[%s0 + $0x8] sm:$0xff]
    %v17 = vld [vmem:[%s1] sm:$0xff]
    %v18 = vld [vmem:[%s1 + $0x8] sm:$0xff]
    %v19 = vld [vmem:[%s1 + $0x10] sm:$0xff]
    %v20 = vld [vmem:[%s1 + $0x18] sm:$0xff]
    %v21 = vld [vmem:[%s2] sm:$0x1]
    %v23 = vlaneseq
    %v24 = vshrl.u32 %v23, 7
    %v25 = vsub.s32 0, %v24
    %v26 = vrot.slane %v21, %v25
    %vm28 = vcmask 261120
    %v30 = vsel %vm28, %v15, 0
    %v33 = vsel %vm28, %v16, 0
    %35 = vmatprep.subr.mxu0 0.0
    %36 = vmatpush1.msra.mxu0 %v17
    %37 = vmatprep.subr.mxu0 0.0
    %38 = vmatpush1.msra.mxu0 %v18
    %39 = vmatprep.subr.mxu0 0.0
    %40 = vmatpush1.msra.mxu0 %v19
    %41 = vmatprep.subr.mxu0 0.0
    %42 = vmatpush1.msra.mxu0 %v20
    %43 = vmatprep.subr.mxu0 0.0
    %44 = vmatpush1.msra.mxu0 0.0
    %45 = vmatprep.subr.mxu0 0.0
    %46 = vmatpush1.msra.mxu0 0.0
    %47 = vmatprep.subr.mxu0 0.0
    %48 = vmatpush1.msra.mxu0 0.0
    %49 = vmatprep.subr.mxu0 0.0
    %50 = vmatpush1.msra.mxu0 0.0
    %51 = vmatprep.subr.mxu0 0.0
    %52 = vmatpush1.msra.mxu0 0.0
    %53 = vmatprep.subr.mxu0 0.0
    %54 = vmatpush1.msra.mxu0 0.0
    %55 = vmatprep.subr.mxu0 0.0
    %56 = vmatpush1.msra.mxu0 0.0
    %57 = vmatprep.subr.mxu0 0.0
    %58 = vmatpush1.msra.mxu0 0.0
    %59 = vmatprep.subr.mxu0 0.0
    %60 = vmatpush1.msra.mxu0 0.0
    %61 = vmatprep.subr.mxu0 0.0
    %62 = vmatpush1.msra.mxu0 0.0
    %63 = vmatprep.subr.mxu0 0.0
    %64 = vmatpush1.msra.mxu0 0.0
    %65 = vmatprep.subr.mxu0 0.0
    %66 = vmatpush1.msra.mxu0 0.0
    %67 = vmatprep.subr.mxu0 0.0
    %68 = vmatpush1.msra.mxu0 0.0
    %69 = vmatprep.subr.mxu0 0.0
    %70 = vmatpush1.msra.mxu0 0.0
    %71 = vmatprep.subr.mxu0 0.0
    %72 = vmatpush1.msra.mxu0 0.0
    %73 = vmatprep.subr.mxu0 0.0
    %74 = vmatpush1.msra.mxu0 0.0
    %75 = vmatprep.subr.mxu0 0.0
    %76 = vmatpush1.msra.mxu0 0.0
    %77 = vmatprep.subr.mxu0 0.0
    %78 = vmatpush1.msra.mxu0 0.0
    %79 = vmatprep.subr.mxu0 0.0
    %80 = vmatpush1.msra.mxu0 0.0
    %81 = vmatprep.subr.mxu0 0.0
    %82 = vmatpush1.msra.mxu0 0.0
    %83 = vmatprep.subr.mxu0 0.0
    %84 = vmatpush1.msra.mxu0 0.0
    %85 = vmatprep.subr.mxu0 0.0
    %86 = vmatpush1.msra.mxu0 0.0
    %87 = vmatprep.subr.mxu0 0.0
    %88 = vmatpush1.msra.mxu0 0.0
    %89 = vmatprep.subr.mxu0 0.0
    %90 = vmatpush1.msra.mxu0 0.0
    %91 = vmatprep.subr.mxu0 0.0
    %92 = vmatpush1.msra.mxu0 0.0
    %93 = vmatprep.subr.mxu0 0.0
    %94 = vmatpush1.msra.mxu0 0.0
    %95 = vmatprep.subr.mxu0 0.0
    %96 = vmatpush1.msra.mxu0 0.0
    %97 = vmatprep.subr.mxu0 0.0
    %98 = vmatpush1.msra.mxu0 0.0
    %99 = vmatprep.mubr.f32.mxu0 0.0
    %100 = vmatmul.mubr.f32.gmra.mrb[0].mxu0 %v30
    %v101 = vpop.f32.mrb[0].mxu0
    %v102 = vadd.f32 %v26, %v101
    %v103 = vpop.f32.mrb[0].mxu0
    %104 = vmatprep.mubr.f32.mxu0 0.0
    %105 = vmatmul.mubr.f32.gmra.mrb[0].mxu0 %v33
    %v106 = vpop.f32.mrb[0].mxu0
    %v107 = vadd.f32 %v26, %v106
    %v108 = vpop.f32.mrb[0].mxu0
    %109 = vdwg.mxu0
    %110 = vst.msk [vmem:[#allocation2] sm:$0xff] %vm28, %v102
    %111 = vst.msk [vmem:[#allocation2 + $0x8] sm:$0xff] %vm28, %v107
    // Predicated region
    $region14: #{multihead_cross_attention.9} parent=1 // pred_check
      _
    $region15: #{multihead_cross_attention.9} parent=1 // pred_check_branch
      %113 = sbr.rel (0) target = $region17
    $region16: #{multihead_cross_attention.9} parent=1 // pred_region
      %s115 = ssub.s32 256, 256
      %116 = vsyncadd [#allocation3], %s115
      %s117 = sshll.u32 [#allocation2], 4
      %s118 = int_to_ptr.vmem [resolvable:$true] %s117
      %123 = dma.vmem_to_hbm [thread:$0]  %s118, 256, %s3, [#allocation3], 128, 128, 8
    $region17: #{multihead_cross_attention.9} parent=1 // pred_fallthru
      _
    // Predicated region
    $region18: #{multihead_cross_attention.9} parent=1 // pred_check
      _
    $region19: #{multihead_cross_attention.9} parent=1 // pred_check_branch
      %125 = sbr.rel (0) target = $region21
    $region20: #{multihead_cross_attention.9} parent=1 // pred_region
      %126 = dma.done [#allocation3], 256
    $region21: #{multihead_cross_attention.9} parent=1 // pred_fallthru
      _
    %127 = vsyncpa [#allocation3], 1

// kernel: multihead_cross_attention.8
$region0: #{multihead_cross_attention.8}
  #allocation0 [shape = 'u32[]', space=smem, size = 0x4, offset = 0x4, fixed_abs, tag = 'smem constant byte address 0x4 - core index']
  #allocation1 [shape = 'u32[144,128]{1,0:T(1,128)}', space=vmem, size = 0x12000, scoped, tag = 'internal scratch']
  #allocation2 [shape = 'f32[4,8,1]{2,1,0:T(8,128)}', space=vmem, size = 0x4000, scoped, tag = 'scratch operand']
  #allocation3 [shape = 'f32[4,8,1]{2,1,0:T(8,128)}', space=vmem, size = 0x4000, scoped, tag = 'scratch operand']
  #allocation4 [shape = 'f32[8,32]{1,0:T(8,128)}', space=vmem, size = 0x1000, scoped, tag = 'scratch operand']
  %s0 = inlined_call_operand.vmem [shape: f32[2,8,32], index: 0, kind: input, shape index: {}]
  %s1 = inlined_call_operand.vmem [shape: f32[2,16,32], index: 1, kind: input, shape index: {}]
  %s2 = inlined_call_operand.vmem [shape: f32[2,16,32], index: 2, kind: input, shape index: {}]
  %s3 = inlined_call_operand.vmem [shape: f32[2,8,32], index: 3, kind: output, shape index: {}]
  %s4 = sld [smem:[#allocation0]]
  $region53: #{multihead_cross_attention.8} parent=0
    _
  %s6 = ssub.s32 1, %s4
  %s7 = scalar_select 0, %s6, %s4
  loop: start=0, step=1, limit=4
  $region2: #{multihead_cross_attention.8} parent=0 // loop_pre_header
    _
  $region3: #{multihead_cross_attention.8} parent=0 // loop_header
    %s9 = sphi 0, %s13
    %p10 = scmp.ge.s32.totalorder %s9, 4
    %s16 = sphi 0, %s35
    %s17 = sphi 0, %s31
    %s18 = sphi 0, %s27
    %s19 = sphi 0, %s16
    %s20 = sphi 0, %s17
    %s21 = sphi 0, %s18
    %s22 = sphi 0, %s19
    %s23 = sphi 0, %s20
    %s24 = sphi 0, %s21
    %s40 = sphi 0, %s42
    %s43 = sphi 0, %s40
    %s44 = sphi 0, %s43
    %s60 = sphi 0, %s44
    %s68 = sphi 0, %s70
    %s71 = sphi 0, %s68
    %s72 = sphi 0, %s71
    %s88 = sphi 0, %s72
    %s96 = sphi 0, %s98
    %s99 = sphi 0, %s96
    %s100 = sphi 0, %s99
    %s116 = sphi 0, %s100
    %s124 = sphi 0, %s126
    %s127 = sphi 0, %s124
    %s128 = sphi 0, %s127
    %s144 = sphi 0, %s128
  $region4: #{multihead_cross_attention.8} parent=0 // loop_header_branch
    %12 = sbr.rel (%p10) target = $region8
  $region5: #{multihead_cross_attention.8} parent=0 // loop_body
    %s14 = ssub.s32 %s9, 1
    %s15 = ssub.s32 %s9, 2
    %s25 = sadd.s32 1, %s18
    %p26 = scmp.ge.s32.totalorder %s25, 1
    %s27 = scalar_select %p26, 0, %s25
    %s28 = sadd.s32 1, %s17
    %s29 = scalar_select %p26, %s28, %s17
    %p30 = scmp.ge.s32.totalorder %s29, 1
    %s31 = scalar_select %p30, 0, %s29
    %s32 = sadd.s32 1, %s16
    %s33 = scalar_select %p30, %s32, %s16
    %p34 = scmp.ge.s32.totalorder %s33, 2
    %s35 = scalar_select %p34, 0, %s33
    %s36 = ssub.s32 %s16, %s35
    %s37 = ssub.s32 %s17, %s31
    %s38 = sor.u32 %s36, %s37
    %p39 = scmp.eq.s32.totalorder %s38, 0
    %s41 = sadd.s32 %s40, 1
    %s42 = scalar_select %p39, %s40, %s41
    %p45 = pneg %p39
    %p46 = scmp.eq.s32.totalorder %s9, 1
    %p47 = por %p45, %p46
    %p48 = scmp.ne.s32.totalorder %s40, %s43
    %p49 = scmp.eq.s32.totalorder %s9, 0
    %p50 = por %p48, %p49
    %p51 = scmp.ne.s32.totalorder %s40, %s43
    %p52 = scmp.eq.s32.totalorder %s14, 1
    %p53 = por %p51, %p52
    %p54 = scmp.ne.s32.totalorder %s43, %s44
    %p55 = scmp.eq.s32.totalorder %s14, 0
    %p56 = por %p54, %p55
    %p57 = scmp.ne.s32.totalorder %s43, %s44
    %p58 = scmp.eq.s32.totalorder %s15, 1
    %p59 = por %p57, %p58
    %p61 = scmp.ne.s32.totalorder %s44, %s60
    %p62 = scmp.eq.s32.totalorder %s15, 0
    %p63 = por %p61, %p62
    %s64 = ssub.s32 %s16, %s35
    %s65 = ssub.s32 %s18, %s27
    %s66 = sor.u32 %s64, %s65
    %p67 = scmp.eq.s32.totalorder %s66, 0
    %s69 = sadd.s32 %s68, 1
    %s70 = scalar_select %p67, %s68, %s69
    %p73 = pneg %p67
    %p74 = scmp.eq.s32.totalorder %s9, 1
    %p75 = por %p73, %p74
    %p76 = scmp.ne.s32.totalorder %s68, %s71
    %p77 = scmp.eq.s32.totalorder %s9, 0
    %p78 = por %p76, %p77
    %p79 = scmp.ne.s32.totalorder %s68, %s71
    %p80 = scmp.eq.s32.totalorder %s14, 1
    %p81 = por %p79, %p80
    %p82 = scmp.ne.s32.totalorder %s71, %s72
    %p83 = scmp.eq.s32.totalorder %s14, 0
    %p84 = por %p82, %p83
    %p85 = scmp.ne.s32.totalorder %s71, %s72
    %p86 = scmp.eq.s32.totalorder %s15, 1
    %p87 = por %p85, %p86
    %p89 = scmp.ne.s32.totalorder %s72, %s88
    %p90 = scmp.eq.s32.totalorder %s15, 0
    %p91 = por %p89, %p90
    %s92 = ssub.s32 %s16, %s35
    %s93 = ssub.s32 %s18, %s27
    %s94 = sor.u32 %s92, %s93
    %p95 = scmp.eq.s32.totalorder %s94, 0
    %s97 = sadd.s32 %s96, 1
    %s98 = scalar_select %p95, %s96, %s97
    %p101 = pneg %p95
    %p102 = scmp.eq.s32.totalorder %s9, 1
    %p103 = por %p101, %p102
    %p104 = scmp.ne.s32.totalorder %s96, %s99
    %p105 = scmp.eq.s32.totalorder %s9, 0
    %p106 = por %p104, %p105
    %p107 = scmp.ne.s32.totalorder %s96, %s99
    %p108 = scmp.eq.s32.totalorder %s14, 1
    %p109 = por %p107, %p108
    %p110 = scmp.ne.s32.totalorder %s99, %s100
    %p111 = scmp.eq.s32.totalorder %s14, 0
    %p112 = por %p110, %p111
    %p113 = scmp.ne.s32.totalorder %s99, %s100
    %p114 = scmp.eq.s32.totalorder %s15, 1
    %p115 = por %p113, %p114
    %p117 = scmp.ne.s32.totalorder %s100, %s116
    %p118 = scmp.eq.s32.totalorder %s15, 0
    %p119 = por %p117, %p118
    %s120 = ssub.s32 %s16, %s35
    %s121 = ssub.s32 %s17, %s31
    %s122 = sor.u32 %s120, %s121
    %p123 = scmp.eq.s32.totalorder %s122, 0
    %s125 = sadd.s32 %s124, 1
    %s126 = scalar_select %p123, %s124, %s125
    %p129 = pneg %p123
    %p130 = scmp.eq.s32.totalorder %s9, 1
    %p131 = por %p129, %p130
    %p132 = scmp.ne.s32.totalorder %s124, %s127
    %p133 = scmp.eq.s32.totalorder %s9, 0
    %p134 = por %p132, %p133
    %p135 = scmp.ne.s32.totalorder %s124, %s127
    %p136 = scmp.eq.s32.totalorder %s14, 1
    %p137 = por %p135, %p136
    %p138 = scmp.ne.s32.totalorder %s127, %s128
    %p139 = scmp.eq.s32.totalorder %s14, 0
    %p140 = por %p138, %p139
    %p141 = scmp.ne.s32.totalorder %s127, %s128
    %p142 = scmp.eq.s32.totalorder %s15, 1
    %p143 = por %p141, %p142
    %p145 = scmp.ne.s32.totalorder %s128, %s144
    %p146 = scmp.eq.s32.totalorder %s15, 0
    %p147 = por %p145, %p146
    %p148 = scmp.le.s32.totalorder 1, %s9
    %p149 = scmp.lt.s32.totalorder %s9, 3
    %p150 = pnand %p148, %p149
    %p151 = pneg %p150
    // Predicated region
    $region9: #{multihead_cross_attention.8} parent=5 // pred_check
      _
    $region10: #{multihead_cross_attention.8} parent=5 // pred_check_branch
      %153 = sbr.rel (%p150) target = $region12
    $region11: #{multihead_cross_attention.8} parent=5 // pred_region
      %s154 = ssub.s32 %s9, 1
    $region12: #{multihead_cross_attention.8} parent=5 // pred_fallthru
      _
    %p155 = scmp.lt.s32.totalorder %s9, 2
    // Predicated region
    $region13: #{multihead_cross_attention.8} parent=5 // pred_check
      %p156 = pneg %p155
    $region14: #{multihead_cross_attention.8} parent=5 // pred_check_branch
      %158 = sbr.rel (%p156) target = $region16
    $region15: #{multihead_cross_attention.8} parent=5 // pred_region
      // Predicated region
      $region17: #{multihead_cross_attention.8} parent=15 // pred_check
        %p159 = pneg %p50
      $region18: #{multihead_cross_attention.8} parent=15 // pred_check_branch
        %161 = sbr.rel (%p159) target = $region20
      $region19: #{multihead_cross_attention.8} parent=15 // pred_region
        %p162 = scmp.lt.s32.totalorder %s16, 1
        %s163 = scalar_select %p162, %s16, 1
        %p164 = scmp.lt.s32.totalorder %s17, 0
        %s165 = scalar_select %p164, %s17, 0
        %s166 = sadd.s32 %s165, %s163
        %s167 = smul.addr %s166, 8
        %s168 = scalar_lea.vmem %s0, %s167
      $region20: #{multihead_cross_attention.8} parent=15 // pred_fallthru
        _
      // Predicated region
      $region21: #{multihead_cross_attention.8} parent=15 // pred_check
        %p169 = pneg %p78
      $region22: #{multihead_cross_attention.8} parent=15 // pred_check_branch
        %171 = sbr.rel (%p169) target = $region24
      $region23: #{multihead_cross_attention.8} parent=15 // pred_region
        %s172 = smul.u32 2, %s18
        %p173 = scmp.lt.s32.totalorder %s16, 1
        %s174 = scalar_select %p173, %s16, 1
        %p175 = scmp.lt.s32.totalorder %s172, 1
        %s176 = scalar_select %p175, %s172, 1
        %s177 = smul.addr %s174, 2
        %s178 = sadd.s32 %s176, %s177
        %s179 = smul.addr %s178, 8
        %s180 = scalar_lea.vmem %s1, %s179
        %s181 = smul.u32 2, %s18
      $region24: #{multihead_cross_attention.8} parent=15 // pred_fallthru
        _
      // Predicated region
      $region25: #{multihead_cross_attention.8} parent=15 // pred_check
        %p182 = pneg %p106
      $region26: #{multihead_cross_attention.8} parent=15 // pred_check_branch
        %184 = sbr.rel (%p182) target = $region28
      $region27: #{multihead_cross_attention.8} parent=15 // pred_region
        %s185 = smul.u32 2, %s18
        %p186 = scmp.lt.s32.totalorder %s16, 1
        %s187 = scalar_select %p186, %s16, 1
        %p188 = scmp.lt.s32.totalorder %s185, 1
        %s189 = scalar_select %p188, %s185, 1
        %s190 = smul.addr %s187, 2
        %s191 = sadd.s32 %s189, %s190
        %s192 = smul.addr %s191, 8
        %s193 = scalar_lea.vmem %s2, %s192
        %s194 = smul.u32 2, %s18
      $region28: #{multihead_cross_attention.8} parent=15 // pred_fallthru
        _
    $region16: #{multihead_cross_attention.8} parent=5 // pred_fallthru
      _
    %p195 = scmp.le.s32.totalorder 1, %s9
    %p196 = scmp.lt.s32.totalorder %s9, 3
    %p197 = pnand %p195, %p196
    %p198 = pneg %p197
    // Predicated region
    $region29: #{multihead_cross_attention.8} parent=5 // pred_check
      _
    $region30: #{multihead_cross_attention.8} parent=5 // pred_check_branch
      %200 = sbr.rel (%p197) target = $region32
    $region31: #{multihead_cross_attention.8} parent=5 // pred_region
      %s201 = ssub.s32 %s9, 1
      %p202 = scmp.lt.s32.totalorder %s19, 1
      %s203 = scalar_select %p202, %s19, 1
      %p204 = scmp.lt.s32.totalorder %s20, 0
      %s205 = scalar_select %p204, %s20, 0
      %s206 = sadd.s32 %s205, %s203
      %s207 = smul.addr %s206, 8
      %s208 = scalar_lea.vmem %s0, %s207
      %p209 = pneg %p56
      %p210 = pneg %p53
      %s211 = smul.u32 2, %s21
      %p212 = scmp.lt.s32.totalorder %s19, 1
      %s213 = scalar_select %p212, %s19, 1
      %p214 = scmp.lt.s32.totalorder %s211, 1
      %s215 = scalar_select %p214, %s211, 1
      %s216 = smul.addr %s213, 2
      %s217 = sadd.s32 %s215, %s216
      %s218 = smul.addr %s217, 8
      %s219 = scalar_lea.vmem %s1, %s218
      %p220 = pneg %p84
      %p221 = pneg %p81
      %s222 = smul.u32 2, %s21
      %p223 = scmp.lt.s32.totalorder %s19, 1
      %s224 = scalar_select %p223, %s19, 1
      %p225 = scmp.lt.s32.totalorder %s222, 1
      %s226 = scalar_select %p225, %s222, 1
      %s227 = smul.addr %s224, 2
      %s228 = sadd.s32 %s226, %s227
      %s229 = smul.addr %s228, 8
      %s230 = scalar_lea.vmem %s2, %s229
      %p231 = pneg %p112
      %p232 = pneg %p109
      %p233 = pneg %p140
      %p234 = pneg %p137
      %p235 = scmp.lt.s32.totalorder %s19, 1
      %s236 = scalar_select %p235, %s19, 1
      %p237 = scmp.lt.s32.totalorder %s20, 0
      %s238 = scalar_select %p237, %s20, 0
      %s239 = sadd.s32 %s238, %s236
      %s240 = smul.addr %s239, 8
      %s241 = scalar_lea.vmem %s3, %s240
      %p242 = scmp.lt.s32.totalorder %s19, 1
      %s243 = scalar_select %p242, %s19, 1
      %p244 = scmp.lt.s32.totalorder %s20, 0
      %s245 = scalar_select %p244, %s20, 0
      %s246 = sadd.s32 %s245, %s243
      %s247 = smul.addr %s246, 8
      %s248 = scalar_lea.vmem %s0, %s247
      %s249 = smul.u32 2, %s21
      %p250 = scmp.lt.s32.totalorder %s19, 1
      %s251 = scalar_select %p250, %s19, 1
      %p252 = scmp.lt.s32.totalorder %s249, 1
      %s253 = scalar_select %p252, %s249, 1
      %s254 = smul.addr %s251, 2
      %s255 = sadd.s32 %s253, %s254
      %s256 = smul.addr %s255, 8
      %s257 = scalar_lea.vmem %s1, %s256
      %s258 = smul.u32 2, %s21
      %s259 = smul.u32 2, %s21
      %p260 = scmp.lt.s32.totalorder %s19, 1
      %s261 = scalar_select %p260, %s19, 1
      %p262 = scmp.lt.s32.totalorder %s259, 1
      %s263 = scalar_select %p262, %s259, 1
      %s264 = smul.addr %s261, 2
      %s265 = sadd.s32 %s263, %s264
      %s266 = smul.addr %s265, 8
      %s267 = scalar_lea.vmem %s2, %s266
      %s268 = smul.u32 2, %s21
      %p269 = scmp.lt.s32.totalorder %s19, 1
      %s270 = scalar_select %p269, %s19, 1
      %p271 = scmp.lt.s32.totalorder %s20, 0
      %s272 = scalar_select %p271, %s20, 0
      %s273 = sadd.s32 %s272, %s270
      %s274 = smul.addr %s273, 8
      %s275 = scalar_lea.vmem %s3, %s274
      %p276 = scmp.eq.s32.totalorder %s21, 0
      // Predicated region
      $region33: #{multihead_cross_attention.8} parent=31 // pred_check
        %p277 = pneg %p276
      $region34: #{multihead_cross_attention.8} parent=31 // pred_check_branch
        %279 = sbr.rel (%p277) target = $region36
      $region35: #{multihead_cross_attention.8} parent=31 // pred_region
        %vm280 = vcmask 7168
        %281 = vst.msk [vmem:[#allocation2] sm:$0xff] %vm280, -inf
        %282 = vst.msk [vmem:[#allocation2 + $0x8] sm:$0xff] %vm280, -inf
        %283 = vst.msk [vmem:[#allocation2 + $0x10] sm:$0xff] %vm280, -inf
        %284 = vst.msk [vmem:[#allocation2 + $0x18] sm:$0xff] %vm280, -inf
        %285 = vst.msk [vmem:[#allocation3] sm:$0xff] %vm280, 0.0
        %286 = vst.msk [vmem:[#allocation3 + $0x8] sm:$0xff] %vm280, 0.0
        %287 = vst.msk [vmem:[#allocation3 + $0x10] sm:$0xff] %vm280, 0.0
        %288 = vst.msk [vmem:[#allocation3 + $0x18] sm:$0xff] %vm280, 0.0
        %vm289 = vcmask 261120
        %290 = vst.msk [vmem:[#allocation4] sm:$0xff] %vm289, 0.0
      $region36: #{multihead_cross_attention.8} parent=31 // pred_fallthru
        _
      %v291 = vld [vmem:[%s248] sm:$0xff]
      %v292 = vmul.f32 %v291, 0.35355338
      %v293 = vld [vmem:[%s257] sm:$0xff]
      %v294 = vld [vmem:[%s257 + $0x8] sm:$0xff]
      %v295 = vld [vmem:[%s267] sm:$0xff]
      %v296 = vld [vmem:[%s267 + $0x8] sm:$0xff]
      %vm297 = vcmask 64512
      %v299 = vsel %vm297, %v292, 0
      %v302 = vsel %vm297, %v293, 0
      %v305 = vsel %vm297, %v294, 0
      %307 = vmatprep.subr.mxu0 0.0
      %308 = vmatpush1.xpose.msra.mxu0 %v302
      %309 = vmatprep.subr.mxu0 0.0
      %310 = vmatpush1.xpose.msra.mxu0 %v305
      %311 = vmatprep.subr.mxu0 0.0
      %312 = vmatpush1.xpose.msra.mxu0 0.0
      %313 = vmatprep.subr.mxu0 0.0
      %314 = vmatpush1.xpose.msra.mxu0 0.0
      %315 = vmatprep.subr.mxu0 0.0
      %316 = vmatpush1.xpose.msra.mxu0 0.0
      %317 = vmatprep.subr.mxu0 0.0
      %318 = vmatpush1.xpose.msra.mxu0 0.0
      %319 = vmatprep.subr.mxu0 0.0
      %320 = vmatpush1.xpose.msra.mxu0 0.0
      %321 = vmatprep.subr.mxu0 0.0
      %322 = vmatpush1.xpose.msra.mxu0 0.0
      %323 = vmatprep.subr.mxu0 0.0
      %324 = vmatpush1.xpose.msra.mxu0 0.0
      %325 = vmatprep.subr.mxu0 0.0
      %326 = vmatpush1.xpose.msra.mxu0 0.0
      %327 = vmatprep.subr.mxu0 0.0
      %328 = vmatpush1.xpose.msra.mxu0 0.0
      %329 = vmatprep.subr.mxu0 0.0
      %330 = vmatpush1.xpose.msra.mxu0 0.0
      %331 = vmatprep.subr.mxu0 0.0
      %332 = vmatpush1.xpose.msra.mxu0 0.0
      %333 = vmatprep.subr.mxu0 0.0
      %334 = vmatpush1.xpose.msra.mxu0 0.0
      %335 = vmatprep.subr.mxu0 0.0
      %336 = vmatpush1.xpose.msra.mxu0 0.0
      %337 = vmatprep.subr.mxu0 0.0
      %338 = vmatpush1.xpose.msra.mxu0 0.0
      %339 = vmatprep.subr.mxu0 0.0
      %340 = vmatpush1.xpose.msra.mxu0 0.0
      %341 = vmatprep.subr.mxu0 0.0
      %342 = vmatpush1.xpose.msra.mxu0 0.0
      %343 = vmatprep.subr.mxu0 0.0
      %344 = vmatpush1.xpose.msra.mxu0 0.0
      %345 = vmatprep.subr.mxu0 0.0
      %346 = vmatpush1.xpose.msra.mxu0 0.0
      %347 = vmatprep.subr.mxu0 0.0
      %348 = vmatpush1.xpose.msra.mxu0 0.0
      %349 = vmatprep.subr.mxu0 0.0
      %350 = vmatpush1.xpose.msra.mxu0 0.0
      %351 = vmatprep.subr.mxu0 0.0
      %352 = vmatpush1.xpose.msra.mxu0 0.0
      %353 = vmatprep.subr.mxu0 0.0
      %354 = vmatpush1.xpose.msra.mxu0 0.0
      %355 = vmatprep.subr.mxu0 0.0
      %356 = vmatpush1.xpose.msra.mxu0 0.0
      %357 = vmatprep.subr.mxu0 0.0
      %358 = vmatpush1.xpose.msra.mxu0 0.0
      %359 = vmatprep.subr.mxu0 0.0
      %360 = vmatpush1.xpose.msra.mxu0 0.0
      %361 = vmatprep.subr.mxu0 0.0
      %362 = vmatpush1.xpose.msra.mxu0 0.0
      %363 = vmatprep.subr.mxu0 0.0
      %364 = vmatpush1.xpose.msra.mxu0 0.0
      %365 = vmatprep.subr.mxu0 0.0
      %366 = vmatpush1.xpose.msra.mxu0 0.0
      %367 = vmatprep.subr.mxu0 0.0
      %368 = vmatpush1.xpose.msra.mxu0 0.0
      %369 = vmatprep.subr.mxu0 0.0
      %370 = vmatpush1.xpose.msra.mxu0 0.0
      %371 = vmatprep.mubr.f32.mxu0 0.0
      %372 = vmatmul.mubr.f32.gmra.mrb[0].mxu0 %v299
      %v373 = vpop.f32.mrb[0].mxu0
      %v374 = vadd.f32 0.0, %v373
      %v375 = vpop.f32.mrb[0].mxu0
      %376 = vdwg.mxu0
      %v377 = vld [vmem:[#allocation2] sm:$0xff]
      %vm378 = vcmask 130048
      %v379 = vsel %vm378, %v374, -inf
      %380 = vmax.xlane.f32.xlu0 %v379
      %v381 = vpop.xlane.xlu0 %380
      %v382 = vmax.f32 %v377, %v381
      %v383 = vsub.f32 %v377, %v382
      %v384 = vmul.f32 %v383, 1.442695
      %v385 = vpow.pop %v384
      %387 = vset.pattern.permute.xlu0 0
      %388 = vperm.xlu0 %387, %v382
      %v389 = vpop.permute.xlu0 %388
      %v391 = vsub.f32 %v374, %v389
      %v392 = vmul.f32 %v391, 1.442695
      %v393 = vpow.pop %v392
      %v394 = vld [vmem:[#allocation3] sm:$0xff]
      %v395 = vmul.f32 %v385, %v394
      %v396 = vsel %vm378, %v393, 0.0
      %397 = vadd.xlane.f32.xlu0 %v396
      %v398 = vpop.xlane.xlu0 %397
      %v399 = vadd.f32 %v395, %v398
      %vm400 = vcmask 7168
      %401 = vst.msk [vmem:[#allocation3] sm:$0xff] %vm400, %v399
      %v403 = vsel %vm378, %v393, 0
      %405 = vmatprep.subr.mxu0 0.0
      %406 = vmatpush1.msra.mxu0 %v295
      %407 = vmatprep.subr.mxu0 0.0
      %408 = vmatpush1.msra.mxu0 %v296
      %409 = vmatprep.subr.mxu0 0.0
      %410 = vmatpush1.msra.mxu0 0.0
      %411 = vmatprep.subr.mxu0 0.0
      %412 = vmatpush1.msra.mxu0 0.0
      %413 = vmatprep.subr.mxu0 0.0
      %414 = vmatpush1.msra.mxu0 0.0
      %415 = vmatprep.subr.mxu0 0.0
      %416 = vmatpush1.msra.mxu0 0.0
      %417 = vmatprep.subr.mxu0 0.0
      %418 = vmatpush1.msra.mxu0 0.0
      %419 = vmatprep.subr.mxu0 0.0
      %420 = vmatpush1.msra.mxu0 0.0
      %421 = vmatprep.subr.mxu0 0.0
      %422 = vmatpush1.msra.mxu0 0.0
      %423 = vmatprep.subr.mxu0 0.0
      %424 = vmatpush1.msra.mxu0 0.0
      %425 = vmatprep.subr.mxu0 0.0
      %426 = vmatpush1.msra.mxu0 0.0
      %427 = vmatprep.subr.mxu0 0.0
      %428 = vmatpush1.msra.mxu0 0.0
      %429 = vmatprep.subr.mxu0 0.0
      %430 = vmatpush1.msra.mxu0 0.0
      %431 = vmatprep.subr.mxu0 0.0
      %432 = vmatpush1.msra.mxu0 0.0
      %433 = vmatprep.subr.mxu0 0.0
      %434 = vmatpush1.msra.mxu0 0.0
      %435 = vmatprep.subr.mxu0 0.0
      %436 = vmatpush1.msra.mxu0 0.0
      %437 = vmatprep.subr.mxu0 0.0
      %438 = vmatpush1.msra.mxu0 0.0
      %439 = vmatprep.subr.mxu0 0.0
      %440 = vmatpush1.msra.mxu0 0.0
      %441 = vmatprep.subr.mxu0 0.0
      %442 = vmatpush1.msra.mxu0 0.0
      %443 = vmatprep.subr.mxu0 0.0
      %444 = vmatpush1.msra.mxu0 0.0
      %445 = vmatprep.subr.mxu0 0.0
      %446 = vmatpush1.msra.mxu0 0.0
      %447 = vmatprep.subr.mxu0 0.0
      %448 = vmatpush1.msra.mxu0 0.0
      %449 = vmatprep.subr.mxu0 0.0
      %450 = vmatpush1.msra.mxu0 0.0
      %451 = vmatprep.subr.mxu0 0.0
      %452 = vmatpush1.msra.mxu0 0.0
      %453 = vmatprep.subr.mxu0 0.0
      %454 = vmatpush1.msra.mxu0 0.0
      %455 = vmatprep.subr.mxu0 0.0
      %456 = vmatpush1.msra.mxu0 0.0
      %457 = vmatprep.subr.mxu0 0.0
      %458 = vmatpush1.msra.mxu0 0.0
      %459 = vmatprep.subr.mxu0 0.0
      %460 = vmatpush1.msra.mxu0 0.0
      %461 = vmatprep.subr.mxu0 0.0
      %462 = vmatpush1.msra.mxu0 0.0
      %463 = vmatprep.subr.mxu0 0.0
      %464 = vmatpush1.msra.mxu0 0.0
      %465 = vmatprep.subr.mxu0 0.0
      %466 = vmatpush1.msra.mxu0 0.0
      %467 = vmatprep.subr.mxu0 0.0
      %468 = vmatpush1.msra.mxu0 0.0
      %469 = vmatprep.mubr.f32.mxu0 0.0
      %470 = vmatmul.mubr.f32.gmra.mrb[0].mxu0 %v403
      %v471 = vpop.f32.mrb[0].mxu0
      %v472 = vadd.f32 0.0, %v471
      %v473 = vpop.f32.mrb[0].mxu0
      %474 = vdwg.mxu0
      %v475 = vld [vmem:[#allocation4] sm:$0xff]
      %477 = vset.pattern.permute.xlu0 0
      %478 = vperm.xlu0 %477, %v385
      %v479 = vpop.permute.xlu0 %478
      %v481 = vmul.f32 %v479, %v475
      %v482 = vadd.f32 %v481, %v472
      %483 = vst.msk [vmem:[#allocation4] sm:$0xff] %vm297, %v482
      %484 = vst.msk [vmem:[#allocation2] sm:$0xff] %vm400, %v382
      %v485 = vld [vmem:[%s248] sm:$0xff]
      %v486 = vmul.f32 %v485, 0.35355338
      %v487 = vld [vmem:[%s257] sm:$0xff]
      %v488 = vld [vmem:[%s257 + $0x8] sm:$0xff]
      %v489 = vld [vmem:[%s267] sm:$0xff]
      %v490 = vld [vmem:[%s267 + $0x8] sm:$0xff]
      %492 = vrot.lane.b32.xlu0 %v486, 120
      %v493 = vpop.permute.xlu0 %492
      %496 = vrot.lane.b32.xlu0 %v487, 120
      %v497 = vpop.permute.xlu0 %496
      %498 = vrot.lane.b32.xlu0 %v488, 120
      %v499 = vpop.permute.xlu0 %498
      %v500 = vsel %vm297, %v493, 0
      %v502 = vsel %vm297, %v497, 0
      %v504 = vsel %vm297, %v499, 0
      %506 = vmatprep.subr.mxu0 0.0
      %507 = vmatpush1.xpose.msra.mxu0 %v502
      %508 = vmatprep.subr.mxu0 0.0
      %509 = vmatpush1.xpose.msra.mxu0 %v504
      %510 = vmatprep.subr.mxu0 0.0
      %511 = vmatpush1.xpose.msra.mxu0 0.0
      %512 = vmatprep.subr.mxu0 0.0
      %513 = vmatpush1.xpose.msra.mxu0 0.0
      %514 = vmatprep.subr.mxu0 0.0
      %515 = vmatpush1.xpose.msra.mxu0 0.0
      %516 = vmatprep.subr.mxu0 0.0
      %517 = vmatpush1.xpose.msra.mxu0 0.0
      %518 = vmatprep.subr.mxu0 0.0
      %519 = vmatpush1.xpose.msra.mxu0 0.0
      %520 = vmatprep.subr.mxu0 0.0
      %521 = vmatpush1.xpose.msra.mxu0 0.0
      %522 = vmatprep.subr.mxu0 0.0
      %523 = vmatpush1.xpose.msra.mxu0 0.0
      %524 = vmatprep.subr.mxu0 0.0
      %525 = vmatpush1.xpose.msra.mxu0 0.0
      %526 = vmatprep.subr.mxu0 0.0
      %527 = vmatpush1.xpose.msra.mxu0 0.0
      %528 = vmatprep.subr.mxu0 0.0
      %529 = vmatpush1.xpose.msra.mxu0 0.0
      %530 = vmatprep.subr.mxu0 0.0
      %531 = vmatpush1.xpose.msra.mxu0 0.0
      %532 = vmatprep.subr.mxu0 0.0
      %533 = vmatpush1.xpose.msra.mxu0 0.0
      %534 = vmatprep.subr.mxu0 0.0
      %535 = vmatpush1.xpose.msra.mxu0 0.0
      %536 = vmatprep.subr.mxu0 0.0
      %537 = vmatpush1.xpose.msra.mxu0 0.0
      %538 = vmatprep.subr.mxu0 0.0
      %539 = vmatpush1.xpose.msra.mxu0 0.0
      %540 = vmatprep.subr.mxu0 0.0
      %541 = vmatpush1.xpose.msra.mxu0 0.0
      %542 = vmatprep.subr.mxu0 0.0
      %543 = vmatpush1.xpose.msra.mxu0 0.0
      %544 = vmatprep.subr.mxu0 0.0
      %545 = vmatpush1.xpose.msra.mxu0 0.0
      %546 = vmatprep.subr.mxu0 0.0
      %547 = vmatpush1.xpose.msra.mxu0 0.0
      %548 = vmatprep.subr.mxu0 0.0
      %549 = vmatpush1.xpose.msra.mxu0 0.0
      %550 = vmatprep.subr.mxu0 0.0
      %551 = vmatpush1.xpose.msra.mxu0 0.0
      %552 = vmatprep.subr.mxu0 0.0
      %553 = vmatpush1.xpose.msra.mxu0 0.0
      %554 = vmatprep.subr.mxu0 0.0
      %555 = vmatpush1.xpose.msra.mxu0 0.0
      %556 = vmatprep.subr.mxu0 0.0
      %557 = vmatpush1.xpose.msra.mxu0 0.0
      %558 = vmatprep.subr.mxu0 0.0
      %559 = vmatpush1.xpose.msra.mxu0 0.0
      %560 = vmatprep.subr.mxu0 0.0
      %561 = vmatpush1.xpose.msra.mxu0 0.0
      %562 = vmatprep.subr.mxu0 0.0
      %563 = vmatpush1.xpose.msra.mxu0 0.0
      %564 = vmatprep.subr.mxu0 0.0
      %565 = vmatpush1.xpose.msra.mxu0 0.0
      %566 = vmatprep.subr.mxu0 0.0
      %567 = vmatpush1.xpose.msra.mxu0 0.0
      %568 = vmatprep.subr.mxu0 0.0
      %569 = vmatpush1.xpose.msra.mxu0 0.0
      %570 = vmatprep.mubr.f32.mxu0 0.0
      %571 = vmatmul.mubr.f32.gmra.mrb[0].mxu0 %v500
      %v572 = vpop.f32.mrb[0].mxu0
      %v573 = vadd.f32 0.0, %v572
      %v574 = vpop.f32.mrb[0].mxu0
      %575 = vdwg.mxu0
      %s576 = scalar_lea.vmem [#allocation2], 8
      %v577 = vld [vmem:[%s576] sm:$0xff]
      %v578 = vsel %vm378, %v573, -inf
      %579 = vmax.xlane.f32.xlu0 %v578
      %v580 = vpop.xlane.xlu0 %579
      %v581 = vmax.f32 %v577, %v580
      %v582 = vsub.f32 %v577, %v581
      %v583 = vmul.f32 %v582, 1.442695
      %v584 = vpow.pop %v583
      %586 = vset.pattern.permute.xlu0 0
      %587 = vperm.xlu0 %586, %v581
      %v588 = vpop.permute.xlu0 %587
      %v590 = vsub.f32 %v573, %v588
      %v591 = vmul.f32 %v590, 1.442695
      %v592 = vpow.pop %v591
      %s593 = scalar_lea.vmem [#allocation3], 8
      %v594 = vld [vmem:[%s593] sm:$0xff]
      %v595 = vmul.f32 %v584, %v594
      %v596 = vsel %vm378, %v592, 0.0
      %597 = vadd.xlane.f32.xlu0 %v596
      %v598 = vpop.xlane.xlu0 %597
      %v599 = vadd.f32 %v595, %v598
      %600 = vst.msk [vmem:[%s593] sm:$0xff] %vm400, %v599
      %603 = vrot.lane.b32.xlu0 %v489, 120
      %v604 = vpop.permute.xlu0 %603
      %605 = vrot.lane.b32.xlu0 %v490, 120
      %v606 = vpop.permute.xlu0 %605
      %v610 = vsel %vm378, %v592, 0
      %612 = vmatprep.subr.mxu0 0.0
      %613 = vmatpush1.msra.mxu0 %v604
      %614 = vmatprep.subr.mxu0 0.0
      %615 = vmatpush1.msra.mxu0 %v606
      %616 = vmatprep.subr.mxu0 0.0
      %617 = vmatpush1.msra.mxu0 0.0
      %618 = vmatprep.subr.mxu0 0.0
      %619 = vmatpush1.msra.mxu0 0.0
      %620 = vmatprep.subr.mxu0 0.0
      %621 = vmatpush1.msra.mxu0 0.0
      %622 = vmatprep.subr.mxu0 0.0
      %623 = vmatpush1.msra.mxu0 0.0
      %624 = vmatprep.subr.mxu0 0.0
      %625 = vmatpush1.msra.mxu0 0.0
      %626 = vmatprep.subr.mxu0 0.0
      %627 = vmatpush1.msra.mxu0 0.0
      %628 = vmatprep.subr.mxu0 0.0
      %629 = vmatpush1.msra.mxu0 0.0
      %630 = vmatprep.subr.mxu0 0.0
      %631 = vmatpush1.msra.mxu0 0.0
      %632 = vmatprep.subr.mxu0 0.0
      %633 = vmatpush1.msra.mxu0 0.0
      %634 = vmatprep.subr.mxu0 0.0
      %635 = vmatpush1.msra.mxu0 0.0
      %636 = vmatprep.subr.mxu0 0.0
      %637 = vmatpush1.msra.mxu0 0.0
      %638 = vmatprep.subr.mxu0 0.0
      %639 = vmatpush1.msra.mxu0 0.0
      %640 = vmatprep.subr.mxu0 0.0
      %641 = vmatpush1.msra.mxu0 0.0
      %642 = vmatprep.subr.mxu0 0.0
      %643 = vmatpush1.msra.mxu0 0.0
      %644 = vmatprep.subr.mxu0 0.0
      %645 = vmatpush1.msra.mxu0 0.0
      %646 = vmatprep.subr.mxu0 0.0
      %647 = vmatpush1.msra.mxu0 0.0
      %648 = vmatprep.subr.mxu0 0.0
      %649 = vmatpush1.msra.mxu0 0.0
      %650 = vmatprep.subr.mxu0 0.0
      %651 = vmatpush1.msra.mxu0 0.0
      %652 = vmatprep.subr.mxu0 0.0
      %653 = vmatpush1.msra.mxu0 0.0
      %654 = vmatprep.subr.mxu0 0.0
      %655 = vmatpush1.msra.mxu0 0.0
      %656 = vmatprep.subr.mxu0 0.0
      %657 = vmatpush1.msra.mxu0 0.0
      %658 = vmatprep.subr.mxu0 0.0
      %659 = vmatpush1.msra.mxu0 0.0
      %660 = vmatprep.subr.mxu0 0.0
      %661 = vmatpush1.msra.mxu0 0.0
      %662 = vmatprep.subr.mxu0 0.0
      %663 = vmatpush1.msra.mxu0 0.0
      %664 = vmatprep.subr.mxu0 0.0
      %665 = vmatpush1.msra.mxu0 0.0
      %666 = vmatprep.subr.mxu0 0.0
      %667 = vmatpush1.msra.mxu0 0.0
      %668 = vmatprep.subr.mxu0 0.0
      %669 = vmatpush1.msra.mxu0 0.0
      %670 = vmatprep.subr.mxu0 0.0
      %671 = vmatpush1.msra.mxu0 0.0
      %672 = vmatprep.subr.mxu0 0.0
      %673 = vmatpush1.msra.mxu0 0.0
      %674 = vmatprep.subr.mxu0 0.0
      %675 = vmatpush1.msra.mxu0 0.0
      %676 = vmatprep.mubr.f32.mxu0 0.0
      %677 = vmatmul.mubr.f32.gmra.mrb[0].mxu0 %v610
      %v678 = vpop.f32.mrb[0].mxu0
      %v679 = vadd.f32 0.0, %v678
      %v680 = vpop.f32.mrb[0].mxu0
      %681 = vdwg.mxu0
      %v682 = vld [vmem:[#allocation4] sm:$0xff]
      %684 = vset.pattern.permute.xlu0 0
      %685 = vperm.xlu0 %684, %v584
      %v686 = vpop.permute.xlu0 %685
      %v688 = vmul.f32 %v686, %v682
      %690 = vrot.lane.b32.xlu0 %v679, 8
      %v691 = vpop.permute.xlu0 %690
      %v693 = vadd.f32 %v688, %v691
      %vm694 = vcmask 130112
      %695 = vst.msk [vmem:[#allocation4] sm:$0xff] %vm694, %v693
      %696 = vst.msk [vmem:[%s576] sm:$0xff] %vm400, %v581
      %v697 = vld [vmem:[%s248] sm:$0xff]
      %v698 = vmul.f32 %v697, 0.35355338
      %v699 = vld [vmem:[%s257] sm:$0xff]
      %v700 = vld [vmem:[%s257 + $0x8] sm:$0xff]
      %v701 = vld [vmem:[%s267] sm:$0xff]
      %v702 = vld [vmem:[%s267 + $0x8] sm:$0xff]
      %704 = vrot.lane.b32.xlu0 %v698, 112
      %v705 = vpop.permute.xlu0 %704
      %708 = vrot.lane.b32.xlu0 %v699, 112
      %v709 = vpop.permute.xlu0 %708
      %710 = vrot.lane.b32.xlu0 %v700, 112
      %v711 = vpop.permute.xlu0 %710
      %v712 = vsel %vm297, %v705, 0
      %v714 = vsel %vm297, %v709, 0
      %v716 = vsel %vm297, %v711, 0
      %718 = vmatprep.subr.mxu0 0.0
      %719 = vmatpush1.xpose.msra.mxu0 %v714
      %720 = vmatprep.subr.mxu0 0.0
      %721 = vmatpush1.xpose.msra.mxu0 %v716
      %722 = vmatprep.subr.mxu0 0.0
      %723 = vmatpush1.xpose.msra.mxu0 0.0
      %724 = vmatprep.subr.mxu0 0.0
      %725 = vmatpush1.xpose.msra.mxu0 0.0
      %726 = vmatprep.subr.mxu0 0.0
      %727 = vmatpush1.xpose.msra.mxu0 0.0
      %728 = vmatprep.subr.mxu0 0.0
      %729 = vmatpush1.xpose.msra.mxu0 0.0
      %730 = vmatprep.subr.mxu0 0.0
      %731 = vmatpush1.xpose.msra.mxu0 0.0
      %732 = vmatprep.subr.mxu0 0.0
      %733 = vmatpush1.xpose.msra.mxu0 0.0
      %734 = vmatprep.subr.mxu0 0.0
      %735 = vmatpush1.xpose.msra.mxu0 0.0
      %736 = vmatprep.subr.mxu0 0.0
      %737 = vmatpush1.xpose.msra.mxu0 0.0
      %738 = vmatprep.subr.mxu0 0.0
      %739 = vmatpush1.xpose.msra.mxu0 0.0
      %740 = vmatprep.subr.mxu0 0.0
      %741 = vmatpush1.xpose.msra.mxu0 0.0
      %742 = vmatprep.subr.mxu0 0.0
      %743 = vmatpush1.xpose.msra.mxu0 0.0
      %744 = vmatprep.subr.mxu0 0.0
      %745 = vmatpush1.xpose.msra.mxu0 0.0
      %746 = vmatprep.subr.mxu0 0.0
      %747 = vmatpush1.xpose.msra.mxu0 0.0
      %748 = vmatprep.subr.mxu0 0.0
      %749 = vmatpush1.xpose.msra.mxu0 0.0
      %750 = vmatprep.subr.mxu0 0.0
      %751 = vmatpush1.xpose.msra.mxu0 0.0
      %752 = vmatprep.subr.mxu0 0.0
      %753 = vmatpush1.xpose.msra.mxu0 0.0
      %754 = vmatprep.subr.mxu0 0.0
      %755 = vmatpush1.xpose.msra.mxu0 0.0
      %756 = vmatprep.subr.mxu0 0.0
      %757 = vmatpush1.xpose.msra.mxu0 0.0
      %758 = vmatprep.subr.mxu0 0.0
      %759 = vmatpush1.xpose.msra.mxu0 0.0
      %760 = vmatprep.subr.mxu0 0.0
      %761 = vmatpush1.xpose.msra.mxu0 0.0
      %762 = vmatprep.subr.mxu0 0.0
      %763 = vmatpush1.xpose.msra.mxu0 0.0
      %764 = vmatprep.subr.mxu0 0.0
      %765 = vmatpush1.xpose.msra.mxu0 0.0
      %766 = vmatprep.subr.mxu0 0.0
      %767 = vmatpush1.xpose.msra.mxu0 0.0
      %768 = vmatprep.subr.mxu0 0.0
      %769 = vmatpush1.xpose.msra.mxu0 0.0
      %770 = vmatprep.subr.mxu0 0.0
      %771 = vmatpush1.xpose.msra.mxu0 0.0
      %772 = vmatprep.subr.mxu0 0.0
      %773 = vmatpush1.xpose.msra.mxu0 0.0
      %774 = vmatprep.subr.mxu0 0.0
      %775 = vmatpush1.xpose.msra.mxu0 0.0
      %776 = vmatprep.subr.mxu0 0.0
      %777 = vmatpush1.xpose.msra.mxu0 0.0
      %778 = vmatprep.subr.mxu0 0.0
      %779 = vmatpush1.xpose.msra.mxu0 0.0
      %780 = vmatprep.subr.mxu0 0.0
      %781 = vmatpush1.xpose.msra.mxu0 0.0
      %782 = vmatprep.mubr.f32.mxu0 0.0
      %783 = vmatmul.mubr.f32.gmra.mrb[0].mxu0 %v712
      %v784 = vpop.f32.mrb[0].mxu0
      %v785 = vadd.f32 0.0, %v784
      %v786 = vpop.f32.mrb[0].mxu0
      %787 = vdwg.mxu0
      %s788 = scalar_lea.vmem [#allocation2], 16
      %v789 = vld [vmem:[%s788] sm:$0xff]
      %v790 = vsel %vm378, %v785, -inf
      %791 = vmax.xlane.f32.xlu0 %v790
      %v792 = vpop.xlane.xlu0 %791
      %v793 = vmax.f32 %v789, %v792
      %v794 = vsub.f32 %v789, %v793
      %v795 = vmul.f32 %v794, 1.442695
      %v796 = vpow.pop %v795
      %798 = vset.pattern.permute.xlu0 0
      %799 = vperm.xlu0 %798, %v793
      %v800 = vpop.permute.xlu0 %799
      %v802 = vsub.f32 %v785, %v800
      %v803 = vmul.f32 %v802, 1.442695
      %v804 = vpow.pop %v803
      %s805 = scalar_lea.vmem [#allocation3], 16
      %v806 = vld [vmem:[%s805] sm:$0xff]
      %v807 = vmul.f32 %v796, %v806
      %v808 = vsel %vm378, %v804, 0.0
      %809 = vadd.xlane.f32.xlu0 %v808
      %v810 = vpop.xlane.xlu0 %809
      %v811 = vadd.f32 %v807, %v810
      %812 = vst.msk [vmem:[%s805] sm:$0xff] %vm400, %v811
      %815 = vrot.lane.b32.xlu0 %v701, 112
      %v816 = vpop.permute.xlu0 %815
      %817 = vrot.lane.b32.xlu0 %v702, 112
      %v818 = vpop.permute.xlu0 %817
      %v822 = vsel %vm378, %v804, 0
      %824 = vmatprep.subr.mxu0 0.0
      %825 = vmatpush1.msra.mxu0 %v816
      %826 = vmatprep.subr.mxu0 0.0
      %827 = vmatpush1.msra.mxu0 %v818
      %828 = vmatprep.subr.mxu0 0.0
      %829 = vmatpush1.msra.mxu0 0.0
      %830 = vmatprep.subr.mxu0 0.0
      %831 = vmatpush1.msra.mxu0 0.0
      %832 = vmatprep.subr.mxu0 0.0
      %833 = vmatpush1.msra.mxu0 0.0
      %834 = vmatprep.subr.mxu0 0.0
      %835 = vmatpush1.msra.mxu0 0.0
      %836 = vmatprep.subr.mxu0 0.0
      %837 = vmatpush1.msra.mxu0 0.0
      %838 = vmatprep.subr.mxu0 0.0
      %839 = vmatpush1.msra.mxu0 0.0
      %840 = vmatprep.subr.mxu0 0.0
      %841 = vmatpush1.msra.mxu0 0.0
      %842 = vmatprep.subr.mxu0 0.0
      %843 = vmatpush1.msra.mxu0 0.0
      %844 = vmatprep.subr.mxu0 0.0
      %845 = vmatpush1.msra.mxu0 0.0
      %846 = vmatprep.subr.mxu0 0.0
      %847 = vmatpush1.msra.mxu0 0.0
      %848 = vmatprep.subr.mxu0 0.0
      %849 = vmatpush1.msra.mxu0 0.0
      %850 = vmatprep.subr.mxu0 0.0
      %851 = vmatpush1.msra.mxu0 0.0
      %852 = vmatprep.subr.mxu0 0.0
      %853 = vmatpush1.msra.mxu0 0.0
      %854 = vmatprep.subr.mxu0 0.0
      %855 = vmatpush1.msra.mxu0 0.0
      %856 = vmatprep.subr.mxu0 0.0
      %857 = vmatpush1.msra.mxu0 0.0
      %858 = vmatprep.subr.mxu0 0.0
      %859 = vmatpush1.msra.mxu0 0.0
      %860 = vmatprep.subr.mxu0 0.0
      %861 = vmatpush1.msra.mxu0 0.0
      %862 = vmatprep.subr.mxu0 0.0
      %863 = vmatpush1.msra.mxu0 0.0
      %864 = vmatprep.subr.mxu0 0.0
      %865 = vmatpush1.msra.mxu0 0.0
      %866 = vmatprep.subr.mxu0 0.0
      %867 = vmatpush1.msra.mxu0 0.0
      %868 = vmatprep.subr.mxu0 0.0
      %869 = vmatpush1.msra.mxu0 0.0
      %870 = vmatprep.subr.mxu0 0.0
      %871 = vmatpush1.msra.mxu0 0.0
      %872 = vmatprep.subr.mxu0 0.0
      %873 = vmatpush1.msra.mxu0 0.0
      %874 = vmatprep.subr.mxu0 0.0
      %875 = vmatpush1.msra.mxu0 0.0
      %876 = vmatprep.subr.mxu0 0.0
      %877 = vmatpush1.msra.mxu0 0.0
      %878 = vmatprep.subr.mxu0 0.0
      %879 = vmatpush1.msra.mxu0 0.0
      %880 = vmatprep.subr.mxu0 0.0
      %881 = vmatpush1.msra.mxu0 0.0
      %882 = vmatprep.subr.mxu0 0.0
      %883 = vmatpush1.msra.mxu0 0.0
      %884 = vmatprep.subr.mxu0 0.0
      %885 = vmatpush1.msra.mxu0 0.0
      %886 = vmatprep.subr.mxu0 0.0
      %887 = vmatpush1.msra.mxu0 0.0
      %888 = vmatprep.mubr.f32.mxu0 0.0
      %889 = vmatmul.mubr.f32.gmra.mrb[0].mxu0 %v822
      %v890 = vpop.f32.mrb[0].mxu0
      %v891 = vadd.f32 0.0, %v890
      %v892 = vpop.f32.mrb[0].mxu0
      %893 = vdwg.mxu0
      %v894 = vld [vmem:[#allocation4] sm:$0xff]
      %896 = vset.pattern.permute.xlu0 0
      %897 = vperm.xlu0 %896, %v796
      %v898 = vpop.permute.xlu0 %897
      %v900 = vmul.f32 %v898, %v894
      %902 = vrot.lane.b32.xlu0 %v891, 16
      %v903 = vpop.permute.xlu0 %902
      %v905 = vadd.f32 %v900, %v903
      %vm906 = vcmask 195712
      %907 = vst.msk [vmem:[#allocation4] sm:$0xff] %vm906, %v905
      %908 = vst.msk [vmem:[%s788] sm:$0xff] %vm400, %v793
      %v909 = vld [vmem:[%s248] sm:$0xff]
      %v910 = vmul.f32 %v909, 0.35355338
      %v911 = vld [vmem:[%s257] sm:$0xff]
      %v912 = vld [vmem:[%s257 + $0x8] sm:$0xff]
      %v913 = vld [vmem:[%s267] sm:$0xff]
      %v914 = vld [vmem:[%s267 + $0x8] sm:$0xff]
      %916 = vrot.lane.b32.xlu0 %v910, 104
      %v917 = vpop.permute.xlu0 %916
      %920 = vrot.lane.b32.xlu0 %v911, 104
      %v921 = vpop.permute.xlu0 %920
      %922 = vrot.lane.b32.xlu0 %v912, 104
      %v923 = vpop.permute.xlu0 %922
      %v924 = vsel %vm297, %v917, 0
      %v926 = vsel %vm297, %v921, 0
      %v928 = vsel %vm297, %v923, 0
      %930 = vmatprep.subr.mxu0 0.0
      %931 = vmatpush1.xpose.msra.mxu0 %v926
      %932 = vmatprep.subr.mxu0 0.0
      %933 = vmatpush1.xpose.msra.mxu0 %v928
      %934 = vmatprep.subr.mxu0 0.0
      %935 = vmatpush1.xpose.msra.mxu0 0.0
      %936 = vmatprep.subr.mxu0 0.0
      %937 = vmatpush1.xpose.msra.mxu0 0.0
      %938 = vmatprep.subr.mxu0 0.0
      %939 = vmatpush1.xpose.msra.mxu0 0.0
      %940 = vmatprep.subr.mxu0 0.0
      %941 = vmatpush1.xpose.msra.mxu0 0.0
      %942 = vmatprep.subr.mxu0 0.0
      %943 = vmatpush1.xpose.msra.mxu0 0.0
      %944 = vmatprep.subr.mxu0 0.0
      %945 = vmatpush1.xpose.msra.mxu0 0.0
      %946 = vmatprep.subr.mxu0 0.0
      %947 = vmatpush1.xpose.msra.mxu0 0.0
      %948 = vmatprep.subr.mxu0 0.0
      %949 = vmatpush1.xpose.msra.mxu0 0.0
      %950 = vmatprep.subr.mxu0 0.0
      %951 = vmatpush1.xpose.msra.mxu0 0.0
      %952 = vmatprep.subr.mxu0 0.0
      %953 = vmatpush1.xpose.msra.mxu0 0.0
      %954 = vmatprep.subr.mxu0 0.0
      %955 = vmatpush1.xpose.msra.mxu0 0.0
      %956 = vmatprep.subr.mxu0 0.0
      %957 = vmatpush1.xpose.msra.mxu0 0.0
      %958 = vmatprep.subr.mxu0 0.0
      %959 = vmatpush1.xpose.msra.mxu0 0.0
      %960 = vmatprep.subr.mxu0 0.0
      %961 = vmatpush1.xpose.msra.mxu0 0.0
      %962 = vmatprep.subr.mxu0 0.0
      %963 = vmatpush1.xpose.msra.mxu0 0.0
      %964 = vmatprep.subr.mxu0 0.0
      %965 = vmatpush1.xpose.msra.mxu0 0.0
      %966 = vmatprep.subr.mxu0 0.0
      %967 = vmatpush1.xpose.msra.mxu0 0.0
      %968 = vmatprep.subr.mxu0 0.0
      %969 = vmatpush1.xpose.msra.mxu0 0.0
      %970 = vmatprep.subr.mxu0 0.0
      %971 = vmatpush1.xpose.msra.mxu0 0.0
      %972 = vmatprep.subr.mxu0 0.0
      %973 = vmatpush1.xpose.msra.mxu0 0.0
      %974 = vmatprep.subr.mxu0 0.0
      %975 = vmatpush1.xpose.msra.mxu0 0.0
      %976 = vmatprep.subr.mxu0 0.0
      %977 = vmatpush1.xpose.msra.mxu0 0.0
      %978 = vmatprep.subr.mxu0 0.0
      %979 = vmatpush1.xpose.msra.mxu0 0.0
      %980 = vmatprep.subr.mxu0 0.0
      %981 = vmatpush1.xpose.msra.mxu0 0.0
      %982 = vmatprep.subr.mxu0 0.0
      %983 = vmatpush1.xpose.msra.mxu0 0.0
      %984 = vmatprep.subr.mxu0 0.0
      %985 = vmatpush1.xpose.msra.mxu0 0.0
      %986 = vmatprep.subr.mxu0 0.0
      %987 = vmatpush1.xpose.msra.mxu0 0.0
      %988 = vmatprep.subr.mxu0 0.0
      %989 = vmatpush1.xpose.msra.mxu0 0.0
      %990 = vmatprep.subr.mxu0 0.0
      %991 = vmatpush1.xpose.msra.mxu0 0.0
      %992 = vmatprep.subr.mxu0 0.0
      %993 = vmatpush1.xpose.msra.mxu0 0.0
      %994 = vmatprep.mubr.f32.mxu0 0.0
      %995 = vmatmul.mubr.f32.gmra.mrb[0].mxu0 %v924
      %v996 = vpop.f32.mrb[0].mxu0
      %v997 = vadd.f32 0.0, %v996
      %v998 = vpop.f32.mrb[0].mxu0
      %999 = vdwg.mxu0
      %s1000 = scalar_lea.vmem [#allocation2], 24
      %v1001 = vld [vmem:[%s1000] sm:$0xff]
      %v1002 = vsel %vm378, %v997, -inf
      %1003 = vmax.xlane.f32.xlu0 %v1002
      %v1004 = vpop.xlane.xlu0 %1003
      %v1005 = vmax.f32 %v1001, %v1004
      %v1006 = vsub.f32 %v1001, %v1005
      %v1007 = vmul.f32 %v1006, 1.442695
      %v1008 = vpow.pop %v1007
      %1010 = vset.pattern.permute.xlu0 0
      %1011 = vperm.xlu0 %1010, %v1005
      %v1012 = vpop.permute.xlu0 %1011
      %v1014 = vsub.f32 %v997, %v1012
      %v1015 = vmul.f32 %v1014, 1.442695
      %v1016 = vpow.pop %v1015
      %s1017 = scalar_lea.vmem [#allocation3], 24
      %v1018 = vld [vmem:[%s1017] sm:$0xff]
      %v1019 = vmul.f32 %v1008, %v1018
      %v1020 = vsel %vm378, %v1016, 0.0
      %1021 = vadd.xlane.f32.xlu0 %v1020
      %v1022 = vpop.xlane.xlu0 %1021
      %v1023 = vadd.f32 %v1019, %v1022
      %1024 = vst.msk [vmem:[%s1017] sm:$0xff] %vm400, %v1023
      %1027 = vrot.lane.b32.xlu0 %v913, 104
      %v1028 = vpop.permute.xlu0 %1027
      %1029 = vrot.lane.b32.xlu0 %v914, 104
      %v1030 = vpop.permute.xlu0 %1029
      %v1034 = vsel %vm378, %v1016, 0
      %1036 = vmatprep.subr.mxu0 0.0
      %1037 = vmatpush1.msra.mxu0 %v1028
      %1038 = vmatprep.subr.mxu0 0.0
      %1039 = vmatpush1.msra.mxu0 %v1030
      %1040 = vmatprep.subr.mxu0 0.0
      %1041 = vmatpush1.msra.mxu0 0.0
      %1042 = vmatprep.subr.mxu0 0.0
      %1043 = vmatpush1.msra.mxu0 0.0
      %1044 = vmatprep.subr.mxu0 0.0
      %1045 = vmatpush1.msra.mxu0 0.0
      %1046 = vmatprep.subr.mxu0 0.0
      %1047 = vmatpush1.msra.mxu0 0.0
      %1048 = vmatprep.subr.mxu0 0.0
      %1049 = vmatpush1.msra.mxu0 0.0
      %1050 = vmatprep.subr.mxu0 0.0
      %1051 = vmatpush1.msra.mxu0 0.0
      %1052 = vmatprep.subr.mxu0 0.0
      %1053 = vmatpush1.msra.mxu0 0.0
      %1054 = vmatprep.subr.mxu0 0.0
      %1055 = vmatpush1.msra.mxu0 0.0
      %1056 = vmatprep.subr.mxu0 0.0
      %1057 = vmatpush1.msra.mxu0 0.0
      %1058 = vmatprep.subr.mxu0 0.0
      %1059 = vmatpush1.msra.mxu0 0.0
      %1060 = vmatprep.subr.mxu0 0.0
      %1061 = vmatpush1.msra.mxu0 0.0
      %1062 = vmatprep.subr.mxu0 0.0
      %1063 = vmatpush1.msra.mxu0 0.0
      %1064 = vmatprep.subr.mxu0 0.0
      %1065 = vmatpush1.msra.mxu0 0.0
      %1066 = vmatprep.subr.mxu0 0.0
      %1067 = vmatpush1.msra.mxu0 0.0
      %1068 = vmatprep.subr.mxu0 0.0
      %1069 = vmatpush1.msra.mxu0 0.0
      %1070 = vmatprep.subr.mxu0 0.0
      %1071 = vmatpush1.msra.mxu0 0.0
      %1072 = vmatprep.subr.mxu0 0.0
      %1073 = vmatpush1.msra.mxu0 0.0
      %1074 = vmatprep.subr.mxu0 0.0
      %1075 = vmatpush1.msra.mxu0 0.0
      %1076 = vmatprep.subr.mxu0 0.0
      %1077 = vmatpush1.msra.mxu0 0.0
      %1078 = vmatprep.subr.mxu0 0.0
      %1079 = vmatpush1.msra.mxu0 0.0
      %1080 = vmatprep.subr.mxu0 0.0
      %1081 = vmatpush1.msra.mxu0 0.0
      %1082 = vmatprep.subr.mxu0 0.0
      %1083 = vmatpush1.msra.mxu0 0.0
      %1084 = vmatprep.subr.mxu0 0.0
      %1085 = vmatpush1.msra.mxu0 0.0
      %1086 = vmatprep.subr.mxu0 0.0
      %1087 = vmatpush1.msra.mxu0 0.0
      %1088 = vmatprep.subr.mxu0 0.0
      %1089 = vmatpush1.msra.mxu0 0.0
      %1090 = vmatprep.subr.mxu0 0.0
      %1091 = vmatpush1.msra.mxu0 0.0
      %1092 = vmatprep.subr.mxu0 0.0
      %1093 = vmatpush1.msra.mxu0 0.0
      %1094 = vmatprep.subr.mxu0 0.0
      %1095 = vmatpush1.msra.mxu0 0.0
      %1096 = vmatprep.subr.mxu0 0.0
      %1097 = vmatpush1.msra.mxu0 0.0
      %1098 = vmatprep.subr.mxu0 0.0
      %1099 = vmatpush1.msra.mxu0 0.0
      %1100 = vmatprep.mubr.f32.mxu0 0.0
      %1101 = vmatmul.mubr.f32.gmra.mrb[0].mxu0 %v1034
      %v1102 = vpop.f32.mrb[0].mxu0
      %v1103 = vadd.f32 0.0, %v1102
      %v1104 = vpop.f32.mrb[0].mxu0
      %1105 = vdwg.mxu0
      %v1106 = vld [vmem:[#allocation4] sm:$0xff]
      %1108 = vset.pattern.permute.xlu0 0
      %1109 = vperm.xlu0 %1108, %v1008
      %v1110 = vpop.permute.xlu0 %1109
      %v1112 = vmul.f32 %v1110, %v1106
      %1114 = vrot.lane.b32.xlu0 %v1103, 24
      %v1115 = vpop.permute.xlu0 %1114
      %v1117 = vadd.f32 %v1112, %v1115
      %vm1118 = vcmask 261312
      %1119 = vst.msk [vmem:[#allocation4] sm:$0xff] %vm1118, %v1117
      %1120 = vst.msk [vmem:[%s1000] sm:$0xff] %vm400, %v1005
      // Predicated region
      $region37: #{multihead_cross_attention.8} parent=31 // pred_check
        %p1121 = pneg %p276
      $region38: #{multihead_cross_attention.8} parent=31 // pred_check_branch
        %1123 = sbr.rel (%p1121) target = $region40
      $region39: #{multihead_cross_attention.8} parent=31 // pred_region
        %v1124 = vld [vmem:[#allocation3] sm:$0xff]
        %v1125 = vrcp.pop %v1124
        %v1126 = vld [vmem:[#allocation4] sm:$0xff]
        %1128 = vset.pattern.permute.xlu0 0
        %1129 = vperm.xlu0 %1128, %v1125
        %v1130 = vpop.permute.xlu0 %1129
        %v1132 = vmul.f32 %v1126, %v1130
        %1133 = vst.msk [vmem:[#allocation4] sm:$0xff] %vm297, %v1132
        %v1134 = vld [vmem:[%s593] sm:$0xff]
        %v1135 = vrcp.pop %v1134
        %v1136 = vld [vmem:[#allocation4] sm:$0xff]
        %1138 = vset.pattern.permute.xlu0 0
        %1139 = vperm.xlu0 %1138, %v1135
        %v1140 = vpop.permute.xlu0 %1139
        %v1142 = vmul.f32 %v1136, %v1140
        %1143 = vst.msk [vmem:[#allocation4] sm:$0xff] %vm694, %v1142
        %v1144 = vld [vmem:[%s805] sm:$0xff]
        %v1145 = vrcp.pop %v1144
        %v1146 = vld [vmem:[#allocation4] sm:$0xff]
        %1148 = vset.pattern.permute.xlu0 0
        %1149 = vperm.xlu0 %1148, %v1145
        %v1150 = vpop.permute.xlu0 %1149
        %v1152 = vmul.f32 %v1146, %v1150
        %1153 = vst.msk [vmem:[#allocation4] sm:$0xff] %vm906, %v1152
        %v1154 = vld [vmem:[%s1017] sm:$0xff]
        %v1155 = vrcp.pop %v1154
        %v1156 = vld [vmem:[#allocation4] sm:$0xff]
        %1158 = vset.pattern.permute.xlu0 0
        %1159 = vperm.xlu0 %1158, %v1155
        %v1160 = vpop.permute.xlu0 %1159
        %v1162 = vmul.f32 %v1156, %v1160
        %1163 = vst.msk [vmem:[#allocation4] sm:$0xff] %vm1118, %v1162
        %v1164 = vld [vmem:[#allocation4] sm:$0xff]
        %vm1165 = vcmask 261120
        %1166 = vst.msk [vmem:[%s275] sm:$0xff] %vm1165, %v1164
      $region40: #{multihead_cross_attention.8} parent=31 // pred_fallthru
        _
      %p1167 = scmp.lt.s32.totalorder %s19, 1
      %s1168 = scalar_select %p1167, %s19, 1
      %p1169 = scmp.lt.s32.totalorder %s20, 0
      %s1170 = scalar_select %p1169, %s20, 0
      %s1171 = sadd.s32 %s1170, %s1168
      %s1172 = smul.addr %s1171, 8
      %s1173 = scalar_lea.vmem %s3, %s1172
      // Predicated region
      $region41: #{multihead_cross_attention.8} parent=31 // pred_check
        %p1174 = pneg %p137
      $region42: #{multihead_cross_attention.8} parent=31 // pred_check_branch
        %1176 = sbr.rel (%p1174) target = $region44
      $region43: #{multihead_cross_attention.8} parent=31 // pred_region
        _
      $region44: #{multihead_cross_attention.8} parent=31 // pred_fallthru
        _
    $region32: #{multihead_cross_attention.8} parent=5 // pred_fallthru
      _
    %p1177 = scmp.le.s32.totalorder 2, %s9
    // Predicated region
    $region45: #{multihead_cross_attention.8} parent=5 // pred_check
      %p1178 = pneg %p1177
    $region46: #{multihead_cross_attention.8} parent=5 // pred_check_branch
      %1180 = sbr.rel (%p1178) target = $region48
    $region47: #{multihead_cross_attention.8} parent=5 // pred_region
      %s1181 = ssub.s32 %s9, 2
      // Predicated region
      $region49: #{multihead_cross_attention.8} parent=47 // pred_check
        %p1182 = pneg %p143
      $region50: #{multihead_cross_attention.8} parent=47 // pred_check_branch
        %1184 = sbr.rel (%p1182) target = $region52
      $region51: #{multihead_cross_attention.8} parent=47 // pred_region
        %p1185 = scmp.lt.s32.totalorder %s22, 1
        %s1186 = scalar_select %p1185, %s22, 1
        %p1187 = scmp.lt.s32.totalorder %s23, 0
        %s1188 = scalar_select %p1187, %s23, 0
        %s1189 = sadd.s32 %s1188, %s1186
        %s1190 = smul.addr %s1189, 8
        %s1191 = scalar_lea.vmem %s3, %s1190
      $region52: #{multihead_cross_attention.8} parent=47 // pred_fallthru
        _
    $region48: #{multihead_cross_attention.8} parent=5 // pred_fallthru
      _
  $region6: #{multihead_cross_attention.8} parent=0 // loop_footer
    %s13 = sadd.s32 1, %s9
  $region7: #{multihead_cross_attention.8} parent=0 // loop_footer_branch
    %8 = sbr.rel target = $region3
  $region8: #{multihead_cross_attention.8} parent=0 // loop_exit
    _

</llo_original>
